<compile_context>
chip_gen: v7x
topology: tpu7x:2x2x1
jax: 0.10.0
libtpu: 0.0.40
codegen_flags: <defaults>
</compile_context>

<pallas_src>
import functools
import math

import jax
import jax.numpy as jnp
from jax import lax
from jax.experimental import pallas as pl
from jax.experimental.pallas import tpu as pltpu


# ------------------------------- fused kernel --------------------------------


def _fused_grouped_attention_kernel(
    q_ref, k_ref, v_ref,
    wq_ref, bq_ref, wk_ref, bk_ref, wv_ref, bv_ref, wo_ref, bo_ref,
    o_ref, attn_scr, *, h, d_k, d_v,
):
    """One batch-block per grid step: block-diag projections + per-(batch,head)
    attention + block-diag output projection, entirely in VMEM."""
    B_blk, nq, d_model = q_ref.shape
    nk = k_ref.shape[1]

    # Flatten the batch block into MXU M rows; cast activations to bf16 once.
    xq = q_ref[...].reshape(B_blk * nq, d_model).astype(jnp.bfloat16)
    xk = k_ref[...].reshape(B_blk * nk, d_model).astype(jnp.bfloat16)
    xv = v_ref[...].reshape(B_blk * nk, d_model).astype(jnp.bfloat16)

    # One wide matmul per projection against bf16 block-diagonal weights
    # (f32 accumulation), single f32 bias add each. 1/sqrt(d_k) is already
    # folded into wq/bq, so no extra scale multiply here.
    qp = (jnp.dot(xq, wq_ref[...], preferred_element_type=jnp.float32)
          + bq_ref[...]).astype(jnp.bfloat16)            # (B*nq, h*d_k)
    kp = (jnp.dot(xk, wk_ref[...], preferred_element_type=jnp.float32)
          + bk_ref[...]).astype(jnp.bfloat16)            # (B*nk, h*d_k)
    vp = (jnp.dot(xv, wv_ref[...], preferred_element_type=jnp.float32)
          + bv_ref[...]).astype(jnp.bfloat16)            # (B*nk, h*d_v)

    # Attention per (batch-in-block, head); rows of each batch element are a
    # contiguous slice of the flattened projections.
    for b in range(B_blk):                                # static, unrolled
        q_b = qp[b * nq:(b + 1) * nq]
        k_b = kp[b * nk:(b + 1) * nk]
        v_b = vp[b * nk:(b + 1) * nk]
        for hi in range(h):                               # static, unrolled
            qh = q_b[:, hi * d_k:(hi + 1) * d_k]          # (nq, d_k) bf16
            kh = k_b[:, hi * d_k:(hi + 1) * d_k]          # (nk, d_k) bf16
            vh = v_b[:, hi * d_v:(hi + 1) * d_v]          # (nk, d_v) bf16
            # Contract over d_k directly (no k^T materialization).
            s = lax.dot_general(qh, kh, (((1,), (1,)), ((), ())),
                                preferred_element_type=jnp.float32)  # (nq,nk)
            s = s - jnp.max(s, axis=-1, keepdims=True)    # f32 softmax
            p = jnp.exp(s)
            p = p * pl.reciprocal(jnp.sum(p, axis=-1, keepdims=True),
                                  approx=True)            # EUP slot
            oh = jnp.dot(p.astype(jnp.bfloat16), vh,
                         preferred_element_type=jnp.float32)          # (nq,d_v)
            # Write the head output straight into its column slice of the
            # scratch (bounds live ranges; no h-way concat relayout).
            attn_scr[b * nq:(b + 1) * nq, hi * d_v:(hi + 1) * d_v] = (
                oh.astype(jnp.bfloat16))

    # Block-diagonal output projection -> (B*nq, d_model), single store.
    out = (jnp.dot(attn_scr[...], wo_ref[...],
                   preferred_element_type=jnp.float32) + bo_ref[...])
    o_ref[...] = out.reshape(B_blk, nq, d_model).astype(o_ref.dtype)


def fused_grouped_attention(q_bnd, k_bnd, v_bnd,
                            wq_bd, bq, wk_bd, bk, wv_bd, bv, wo_bd, bo,
                            *, h, d_k, d_v):
    """q/k/v: (b_s, n, d_model) f32; weights: bf16 block-diag (in, out);
    biases: f32 (1, out). Returns (b_s, nq, d_model)."""
    b_s, nq, d_model = q_bnd.shape
    nk = k_bnd.shape[1]

    # Batch blocking: amortize per-grid-step overhead while keeping >=2
    # parallel steps so both v7x TensorCores get work (near-zero cost on the
    # single-TC v5e/v6e). For b_s=2 this is one batch element per step.
    if b_s >= 2 and b_s % 2 == 0:
        num_blocks, b_blk = 2, b_s // 2
    else:
        num_blocks, b_blk = b_s, 1
    # TODO(synk): for long sequences, add nk-tiled online softmax and re-derive
    # block sizes per generation (v7x has 64 MiB VMEM vs 128 MiB on v5e/v6e).

    kern = functools.partial(_fused_grouped_attention_kernel,
                             h=h, d_k=d_k, d_v=d_v)
    _res2 = lambda i: (0, 0)   # weights/biases: constant block -> VMEM-resident

    return pl.pallas_call(
        kern,
        out_shape=jax.ShapeDtypeStruct((b_s, nq, d_model), q_bnd.dtype),
        grid=(num_blocks,),
        in_specs=[
            pl.BlockSpec((b_blk, nq, d_model), lambda i: (i, 0, 0)),
            pl.BlockSpec((b_blk, nk, d_model), lambda i: (i, 0, 0)),
            pl.BlockSpec((b_blk, nk, d_model), lambda i: (i, 0, 0)),
            pl.BlockSpec(wq_bd.shape, _res2), pl.BlockSpec(bq.shape, _res2),
            pl.BlockSpec(wk_bd.shape, _res2), pl.BlockSpec(bk.shape, _res2),
            pl.BlockSpec(wv_bd.shape, _res2), pl.BlockSpec(bv.shape, _res2),
            pl.BlockSpec(wo_bd.shape, _res2), pl.BlockSpec(bo.shape, _res2),
        ],
        out_specs=pl.BlockSpec((b_blk, nq, d_model), lambda i: (i, 0, 0)),
        scratch_shapes=[pltpu.VMEM((b_blk * nq, h * d_v), jnp.bfloat16)],
        compiler_params=pltpu.CompilerParams(
            dimension_semantics=("parallel",),       # both v7x TCs busy
            vmem_limit_bytes=32 * 1024 * 1024,       # KiB-scale here; safe on v7x
        ),
    )(q_bnd, k_bnd, v_bnd, wq_bd, bq, wk_bd, bk, wv_bd, bv, wo_bd, bo)


# ------------------------------ module port ----------------------------------


class LScaledDotProductAttentionPallas:
    def __init__(self, d_model, d_k, d_v, h, dropout=0.1, groups=2, *, key):
        self.d_model, self.d_k, self.d_v, self.h, self.groups = (
            d_model, d_k, d_v, h, groups)
        # dropout is identity at inference (the only mode implemented here).

        def xavier(k, out_f, in_f):
            # torch xavier_uniform_ on an (out, in) weight; we store (in, out).
            limit = math.sqrt(6.0 / (in_f + out_f))
            w = jax.random.uniform(k, (out_f, in_f), jnp.float32, -limit, limit)
            return jnp.transpose(w)

        kq, kk, kv, ko = jax.random.split(key, 4)
        g = groups
        # Per-group weights, SHARED across groups (matches torch's single fc_*).
        self.w_q_g = xavier(kq, h * d_k // g, d_model // g)
        self.w_k_g = xavier(kk, h * d_k // g, d_model // g)
        self.w_v_g = xavier(kv, h * d_v // g, d_model // g)
        self.w_o_g = xavier(ko, d_model // g, h * d_v // g)
        self.b_q_g = jnp.zeros((1, h * d_k // g), jnp.float32)
        self.b_k_g = jnp.zeros((1, h * d_k // g), jnp.float32)
        self.b_v_g = jnp.zeros((1, h * d_v // g), jnp.float32)
        self.b_o_g = jnp.zeros((1, d_model // g), jnp.float32)

        # Kernel-side params, built once:
        #   block-diag weights (same per-group block replicated g times on the
        #   diagonal — preserves the shared-weight semantics), bias tiled to
        #   full width, 1/sqrt(d_k) folded into the q path, weights cast bf16.
        scale = 1.0 / math.sqrt(d_k)
        eye_g = jnp.eye(g, dtype=jnp.float32)
        self.wq_bd = (jnp.kron(eye_g, self.w_q_g) * scale).astype(jnp.bfloat16)
        self.wk_bd = jnp.kron(eye_g, self.w_k_g).astype(jnp.bfloat16)
        self.wv_bd = jnp.kron(eye_g, self.w_v_g).astype(jnp.bfloat16)
        self.wo_bd = jnp.kron(eye_g, self.w_o_g).astype(jnp.bfloat16)
        self.bq_full = jnp.tile(self.b_q_g, (1, g)) * scale
        self.bk_full = jnp.tile(self.b_k_g, (1, g))
        self.bv_full = jnp.tile(self.b_v_g, (1, g))
        self.bo_full = jnp.tile(self.b_o_g, (1, g))

    def __call__(self, queries, keys, values, attention_mask=None):
        # TODO(synk): attention_mask (masked_fill with -inf) is not wired into
        # the kernel; only attention_mask=None inference is supported.
        assert attention_mask is None
        # TODO(synk): for large tensors, accept (batch, seq, d) at the module
        # boundary to skip these HBM-level transposes (negligible at test size).
        q_in = jnp.transpose(queries, (1, 0, 2))  # (b_s, nq, d_model)
        k_in = jnp.transpose(keys, (1, 0, 2))
        v_in = jnp.transpose(values, (1, 0, 2))
        out = fused_grouped_attention(
            q_in, k_in, v_in,
            self.wq_bd, self.bq_full, self.wk_bd, self.bk_full,
            self.wv_bd, self.bv_full, self.wo_bd, self.bo_full,
            h=self.h, d_k=self.d_k, d_v=self.d_v)
        return jnp.transpose(out, (1, 0, 2))       # (nq, b_s, d_model)

    # pure-JAX f32 reference for correctness checking (matches the torch math)
    def reference(self, queries, keys, values):
        q_in = jnp.transpose(queries, (1, 0, 2))
        k_in = jnp.transpose(keys, (1, 0, 2))
        v_in = jnp.transpose(values, (1, 0, 2))
        b_s, nq, _ = q_in.shape
        nk = k_in.shape[1]
        g, h, d_k, d_v = self.groups, self.h, self.d_k, self.d_v
        dmg = self.d_model // g
        q = (q_in.reshape(b_s, nq, g, dmg) @ self.w_q_g + self.b_q_g
             ).reshape(b_s, nq, h, d_k).transpose(0, 2, 1, 3)
        k = (k_in.reshape(b_s, nk, g, dmg) @ self.w_k_g + self.b_k_g
             ).reshape(b_s, nk, h, d_k).transpose(0, 2, 3, 1)
        v = (v_in.reshape(b_s, nk, g, dmg) @ self.w_v_g + self.b_v_g
             ).reshape(b_s, nk, h, d_v).transpose(0, 2, 1, 3)
        att = jax.nn.softmax(q @ k / math.sqrt(d_k), axis=-1)
        out = (att @ v).transpose(0, 2, 1, 3).reshape(b_s, nq, h * d_v)
        out = (out.reshape(b_s, nq, g, h * d_v // g) @ self.w_o_g + self.b_o_g
               ).reshape(b_s, nq, self.d_model)
        return jnp.transpose(out, (1, 0, 2))


# ---------------------------------- main -------------------------------------

if __name__ == "__main__":
    d_model, d_k, d_v, h, groups = 32, 16, 16, 4, 2
    seq, batch = 8, 2

    root = jax.random.PRNGKey(0)
    k_params, kq, kk, kv = jax.random.split(root, 4)
    mod = LScaledDotProductAttentionPallas(d_model, d_k, d_v, h, dropout=0.1,
                                           groups=groups, key=k_params)

    queries = jax.random.normal(kq, (seq, batch, d_model), jnp.float32)
    keys = jax.random.normal(kk, (seq, batch, d_model), jnp.float32)
    values = jax.random.normal(kv, (seq, batch, d_model), jnp.float32)

    out = mod(queries, keys, values)
    out = jax.block_until_ready(out)

    ref = mod.reference(queries, keys, values)
    assert out.shape == (seq, batch, d_model)
    # bf16 MXU inputs + approx reciprocal -> relax tolerance vs. f32 reference.
    assert jnp.allclose(out, ref, atol=5e-2, rtol=5e-2), \
        float(jnp.max(jnp.abs(out - ref)))

    print("KERNEL_OK")
</pallas_src>

<mosaic_0001>
module attributes {stable_mosaic.version = 11 : i64} {
  func.func @_fused_grouped_attention_kernel(%arg0: i32, %arg1: memref<1x8x32xf32, #tpu.memory_space<vmem>>, %arg2: memref<1x8x32xf32, #tpu.memory_space<vmem>>, %arg3: memref<1x8x32xf32, #tpu.memory_space<vmem>>, %arg4: memref<32x64xbf16, #tpu.memory_space<vmem>>, %arg5: memref<1x64xf32, #tpu.memory_space<vmem>>, %arg6: memref<32x64xbf16, #tpu.memory_space<vmem>>, %arg7: memref<1x64xf32, #tpu.memory_space<vmem>>, %arg8: memref<32x64xbf16, #tpu.memory_space<vmem>>, %arg9: memref<1x64xf32, #tpu.memory_space<vmem>>, %arg10: memref<64x32xbf16, #tpu.memory_space<vmem>>, %arg11: memref<1x32xf32, #tpu.memory_space<vmem>>, %arg12: memref<1x8x32xf32, #tpu.memory_space<vmem>>, %arg13: memref<8x64xbf16, #tpu.memory_space<vmem>>) attributes {dimension_semantics = [#tpu.dimension_semantics<parallel>], iteration_bounds = array<i64: 2>, scalar_prefetch = 0 : i64, scratch_operands = 1 : i64, tpu.core_type = #tpu.core_type<tc>, window_params = [{transform_indices = @transform_0, window_bounds = array<i64: 1, 8, 32>}, {transform_indices = @transform_1, window_bounds = array<i64: 1, 8, 32>}, {transform_indices = @transform_2, window_bounds = array<i64: 1, 8, 32>}, {pipeline_mode = #tpu.pipeline_mode<synchronous>, transform_indices = @transform_3, window_bounds = array<i64: 32, 64>}, {pipeline_mode = #tpu.pipeline_mode<synchronous>, transform_indices = @transform_4, window_bounds = array<i64: 1, 64>}, {pipeline_mode = #tpu.pipeline_mode<synchronous>, transform_indices = @transform_5, window_bounds = array<i64: 32, 64>}, {pipeline_mode = #tpu.pipeline_mode<synchronous>, transform_indices = @transform_6, window_bounds = array<i64: 1, 64>}, {pipeline_mode = #tpu.pipeline_mode<synchronous>, transform_indices = @transform_7, window_bounds = array<i64: 32, 64>}, {pipeline_mode = #tpu.pipeline_mode<synchronous>, transform_indices = @transform_8, window_bounds = array<i64: 1, 64>}, {pipeline_mode = #tpu.pipeline_mode<synchronous>, transform_indices = @transform_9, window_bounds = array<i64: 64, 32>}, {pipeline_mode = #tpu.pipeline_mode<synchronous>, transform_indices = @transform_10, window_bounds = array<i64: 1, 32>}, {transform_indices = @transform_11, window_bounds = array<i64: 1, 8, 32>}]} {
    %c0 = arith.constant 0 : index
    %c0_0 = arith.constant 0 : index
    %c0_1 = arith.constant 0 : index
    %0 = vector.load %arg1[%c0, %c0_0, %c0_1] : memref<1x8x32xf32, #tpu.memory_space<vmem>>, vector<1x8x32xf32>
    %1 = vector.shape_cast %0 : vector<1x8x32xf32> to vector<8x32xf32>
    %2 = arith.truncf %1 : vector<8x32xf32> to vector<8x32xbf16>
    %c0_2 = arith.constant 0 : index
    %c0_3 = arith.constant 0 : index
    %c0_4 = arith.constant 0 : index
    %3 = vector.load %arg2[%c0_2, %c0_3, %c0_4] : memref<1x8x32xf32, #tpu.memory_space<vmem>>, vector<1x8x32xf32>
    %4 = vector.shape_cast %3 : vector<1x8x32xf32> to vector<8x32xf32>
    %5 = arith.truncf %4 : vector<8x32xf32> to vector<8x32xbf16>
    %c0_5 = arith.constant 0 : index
    %c0_6 = arith.constant 0 : index
    %c0_7 = arith.constant 0 : index
    %6 = vector.load %arg3[%c0_5, %c0_6, %c0_7] : memref<1x8x32xf32, #tpu.memory_space<vmem>>, vector<1x8x32xf32>
    %7 = vector.shape_cast %6 : vector<1x8x32xf32> to vector<8x32xf32>
    %8 = arith.truncf %7 : vector<8x32xf32> to vector<8x32xbf16>
    %c0_8 = arith.constant 0 : index
    %c0_9 = arith.constant 0 : index
    %9 = vector.load %arg4[%c0_8, %c0_9] : memref<32x64xbf16, #tpu.memory_space<vmem>>, vector<32x64xbf16>
    %cst = arith.constant dense<0.000000e+00> : vector<8x64xf32>
    %10 = tpu.matmul %2, %9, %cst {dimension_numbers = #tpu.dot_dimension_numbers<[1], [0], [0], [1], [0, 0, 1, 1], [], []>} : vector<8x32xbf16>, vector<32x64xbf16>, vector<8x64xf32> -> vector<8x64xf32>
    %c0_10 = arith.constant 0 : index
    %c0_11 = arith.constant 0 : index
    %11 = vector.load %arg5[%c0_10, %c0_11] : memref<1x64xf32, #tpu.memory_space<vmem>>, vector<1x64xf32>
    %12 = vector.broadcast %11 : vector<1x64xf32> to vector<8x64xf32>
    %13 = arith.addf %10, %12 : vector<8x64xf32>
    %14 = arith.truncf %13 : vector<8x64xf32> to vector<8x64xbf16>
    %c0_12 = arith.constant 0 : index
    %c0_13 = arith.constant 0 : index
    %15 = vector.load %arg6[%c0_12, %c0_13] : memref<32x64xbf16, #tpu.memory_space<vmem>>, vector<32x64xbf16>
    %cst_14 = arith.constant dense<0.000000e+00> : vector<8x64xf32>
    %16 = tpu.matmul %5, %15, %cst_14 {dimension_numbers = #tpu.dot_dimension_numbers<[1], [0], [0], [1], [0, 0, 1, 1], [], []>} : vector<8x32xbf16>, vector<32x64xbf16>, vector<8x64xf32> -> vector<8x64xf32>
    %c0_15 = arith.constant 0 : index
    %c0_16 = arith.constant 0 : index
    %17 = vector.load %arg7[%c0_15, %c0_16] : memref<1x64xf32, #tpu.memory_space<vmem>>, vector<1x64xf32>
    %18 = vector.broadcast %17 : vector<1x64xf32> to vector<8x64xf32>
    %19 = arith.addf %16, %18 : vector<8x64xf32>
    %20 = arith.truncf %19 : vector<8x64xf32> to vector<8x64xbf16>
    %c0_17 = arith.constant 0 : index
    %c0_18 = arith.constant 0 : index
    %21 = vector.load %arg8[%c0_17, %c0_18] : memref<32x64xbf16, #tpu.memory_space<vmem>>, vector<32x64xbf16>
    %cst_19 = arith.constant dense<0.000000e+00> : vector<8x64xf32>
    %22 = tpu.matmul %8, %21, %cst_19 {dimension_numbers = #tpu.dot_dimension_numbers<[1], [0], [0], [1], [0, 0, 1, 1], [], []>} : vector<8x32xbf16>, vector<32x64xbf16>, vector<8x64xf32> -> vector<8x64xf32>
    %c0_20 = arith.constant 0 : index
    %c0_21 = arith.constant 0 : index
    %23 = vector.load %arg9[%c0_20, %c0_21] : memref<1x64xf32, #tpu.memory_space<vmem>>, vector<1x64xf32>
    %24 = vector.broadcast %23 : vector<1x64xf32> to vector<8x64xf32>
    %25 = arith.addf %22, %24 : vector<8x64xf32>
    %26 = arith.truncf %25 : vector<8x64xf32> to vector<8x64xbf16>
    %27 = vector.extract_strided_slice %14 {offsets = [0, 0], sizes = [8, 16], strides = [1, 1]} : vector<8x64xbf16> to vector<8x16xbf16>
    %28 = vector.extract_strided_slice %20 {offsets = [0, 0], sizes = [8, 16], strides = [1, 1]} : vector<8x64xbf16> to vector<8x16xbf16>
    %29 = vector.extract_strided_slice %26 {offsets = [0, 0], sizes = [8, 16], strides = [1, 1]} : vector<8x64xbf16> to vector<8x16xbf16>
    %cst_22 = arith.constant dense<0.000000e+00> : vector<8x8xf32>
    %30 = tpu.matmul %27, %28, %cst_22 {dimension_numbers = #tpu.dot_dimension_numbers<[1], [1], [0], [0], [0, 0, 1, 0], [], []>} : vector<8x16xbf16>, vector<8x16xbf16>, vector<8x8xf32> -> vector<8x8xf32>
    %cst_23 = arith.constant dense<0xFF800000> : vector<8xf32>
    %31 = vector.multi_reduction <maximumf>, %30, %cst_23 [1] : vector<8x8xf32> to vector<8xf32>
    %32 = vector.shape_cast %31 : vector<8xf32> to vector<8x1xf32>
    %33 = vector.broadcast %32 : vector<8x1xf32> to vector<8x8xf32>
    %34 = arith.subf %30, %33 : vector<8x8xf32>
    %35 = math.exp %34 : vector<8x8xf32>
    %cst_24 = arith.constant dense<0.000000e+00> : vector<8xf32>
    %36 = vector.multi_reduction <add>, %35, %cst_24 [1] : vector<8x8xf32> to vector<8xf32>
    %37 = vector.shape_cast %36 : vector<8xf32> to vector<8x1xf32>
    %38 = tpu.reciprocal %37 {approx = true} : vector<8x1xf32> -> vector<8x1xf32>
    %39 = vector.broadcast %38 : vector<8x1xf32> to vector<8x8xf32>
    %40 = arith.mulf %35, %39 : vector<8x8xf32>
    %41 = arith.truncf %40 : vector<8x8xf32> to vector<8x8xbf16>
    %cst_25 = arith.constant dense<0.000000e+00> : vector<8x16xf32>
    %42 = tpu.matmul %41, %29, %cst_25 {dimension_numbers = #tpu.dot_dimension_numbers<[1], [0], [0], [1], [0, 0, 1, 1], [], []>} : vector<8x8xbf16>, vector<8x16xbf16>, vector<8x16xf32> -> vector<8x16xf32>
    %43 = arith.truncf %42 : vector<8x16xf32> to vector<8x16xbf16>
    %c0_26 = arith.constant 0 : index
    %c0_27 = arith.constant 0 : index
    %44 = vector.load %arg13[%c0_26, %c0_27] : memref<8x64xbf16, #tpu.memory_space<vmem>>, vector<8x16xbf16>
    tpu.vector_store %arg13[%c0_26, %c0_27], %43 {strides = array<i32>} : memref<8x64xbf16, #tpu.memory_space<vmem>>, vector<8x16xbf16>,
    %45 = vector.extract_strided_slice %14 {offsets = [0, 16], sizes = [8, 16], strides = [1, 1]} : vector<8x64xbf16> to vector<8x16xbf16>
    %46 = vector.extract_strided_slice %20 {offsets = [0, 16], sizes = [8, 16], strides = [1, 1]} : vector<8x64xbf16> to vector<8x16xbf16>
    %47 = vector.extract_strided_slice %26 {offsets = [0, 16], sizes = [8, 16], strides = [1, 1]} : vector<8x64xbf16> to vector<8x16xbf16>
    %cst_28 = arith.constant dense<0.000000e+00> : vector<8x8xf32>
    %48 = tpu.matmul %45, %46, %cst_28 {dimension_numbers = #tpu.dot_dimension_numbers<[1], [1], [0], [0], [0, 0, 1, 0], [], []>} : vector<8x16xbf16>, vector<8x16xbf16>, vector<8x8xf32> -> vector<8x8xf32>
    %cst_29 = arith.constant dense<0xFF800000> : vector<8xf32>
    %49 = vector.multi_reduction <maximumf>, %48, %cst_29 [1] : vector<8x8xf32> to vector<8xf32>
    %50 = vector.shape_cast %49 : vector<8xf32> to vector<8x1xf32>
    %51 = vector.broadcast %50 : vector<8x1xf32> to vector<8x8xf32>
    %52 = arith.subf %48, %51 : vector<8x8xf32>
    %53 = math.exp %52 : vector<8x8xf32>
    %cst_30 = arith.constant dense<0.000000e+00> : vector<8xf32>
    %54 = vector.multi_reduction <add>, %53, %cst_30 [1] : vector<8x8xf32> to vector<8xf32>
    %55 = vector.shape_cast %54 : vector<8xf32> to vector<8x1xf32>
    %56 = tpu.reciprocal %55 {approx = true} : vector<8x1xf32> -> vector<8x1xf32>
    %57 = vector.broadcast %56 : vector<8x1xf32> to vector<8x8xf32>
    %58 = arith.mulf %53, %57 : vector<8x8xf32>
    %59 = arith.truncf %58 : vector<8x8xf32> to vector<8x8xbf16>
    %cst_31 = arith.constant dense<0.000000e+00> : vector<8x16xf32>
    %60 = tpu.matmul %59, %47, %cst_31 {dimension_numbers = #tpu.dot_dimension_numbers<[1], [0], [0], [1], [0, 0, 1, 1], [], []>} : vector<8x8xbf16>, vector<8x16xbf16>, vector<8x16xf32> -> vector<8x16xf32>
    %61 = arith.truncf %60 : vector<8x16xf32> to vector<8x16xbf16>
    %c0_32 = arith.constant 0 : index
    %c16 = arith.constant 16 : index
    %62 = vector.load %arg13[%c0_32, %c16] : memref<8x64xbf16, #tpu.memory_space<vmem>>, vector<8x16xbf16>
    tpu.vector_store %arg13[%c0_32, %c16], %61 {strides = array<i32>} : memref<8x64xbf16, #tpu.memory_space<vmem>>, vector<8x16xbf16>,
    %63 = vector.extract_strided_slice %14 {offsets = [0, 32], sizes = [8, 16], strides = [1, 1]} : vector<8x64xbf16> to vector<8x16xbf16>
    %64 = vector.extract_strided_slice %20 {offsets = [0, 32], sizes = [8, 16], strides = [1, 1]} : vector<8x64xbf16> to vector<8x16xbf16>
    %65 = vector.extract_strided_slice %26 {offsets = [0, 32], sizes = [8, 16], strides = [1, 1]} : vector<8x64xbf16> to vector<8x16xbf16>
    %cst_33 = arith.constant dense<0.000000e+00> : vector<8x8xf32>
    %66 = tpu.matmul %63, %64, %cst_33 {dimension_numbers = #tpu.dot_dimension_numbers<[1], [1], [0], [0], [0, 0, 1, 0], [], []>} : vector<8x16xbf16>, vector<8x16xbf16>, vector<8x8xf32> -> vector<8x8xf32>
    %cst_34 = arith.constant dense<0xFF800000> : vector<8xf32>
    %67 = vector.multi_reduction <maximumf>, %66, %cst_34 [1] : vector<8x8xf32> to vector<8xf32>
    %68 = vector.shape_cast %67 : vector<8xf32> to vector<8x1xf32>
    %69 = vector.broadcast %68 : vector<8x1xf32> to vector<8x8xf32>
    %70 = arith.subf %66, %69 : vector<8x8xf32>
    %71 = math.exp %70 : vector<8x8xf32>
    %cst_35 = arith.constant dense<0.000000e+00> : vector<8xf32>
    %72 = vector.multi_reduction <add>, %71, %cst_35 [1] : vector<8x8xf32> to vector<8xf32>
    %73 = vector.shape_cast %72 : vector<8xf32> to vector<8x1xf32>
    %74 = tpu.reciprocal %73 {approx = true} : vector<8x1xf32> -> vector<8x1xf32>
    %75 = vector.broadcast %74 : vector<8x1xf32> to vector<8x8xf32>
    %76 = arith.mulf %71, %75 : vector<8x8xf32>
    %77 = arith.truncf %76 : vector<8x8xf32> to vector<8x8xbf16>
    %cst_36 = arith.constant dense<0.000000e+00> : vector<8x16xf32>
    %78 = tpu.matmul %77, %65, %cst_36 {dimension_numbers = #tpu.dot_dimension_numbers<[1], [0], [0], [1], [0, 0, 1, 1], [], []>} : vector<8x8xbf16>, vector<8x16xbf16>, vector<8x16xf32> -> vector<8x16xf32>
    %79 = arith.truncf %78 : vector<8x16xf32> to vector<8x16xbf16>
    %c0_37 = arith.constant 0 : index
    %c32 = arith.constant 32 : index
    %80 = vector.load %arg13[%c0_37, %c32] : memref<8x64xbf16, #tpu.memory_space<vmem>>, vector<8x16xbf16>
    tpu.vector_store %arg13[%c0_37, %c32], %79 {strides = array<i32>} : memref<8x64xbf16, #tpu.memory_space<vmem>>, vector<8x16xbf16>,
    %81 = vector.extract_strided_slice %14 {offsets = [0, 48], sizes = [8, 16], strides = [1, 1]} : vector<8x64xbf16> to vector<8x16xbf16>
    %82 = vector.extract_strided_slice %20 {offsets = [0, 48], sizes = [8, 16], strides = [1, 1]} : vector<8x64xbf16> to vector<8x16xbf16>
    %83 = vector.extract_strided_slice %26 {offsets = [0, 48], sizes = [8, 16], strides = [1, 1]} : vector<8x64xbf16> to vector<8x16xbf16>
    %cst_38 = arith.constant dense<0.000000e+00> : vector<8x8xf32>
    %84 = tpu.matmul %81, %82, %cst_38 {dimension_numbers = #tpu.dot_dimension_numbers<[1], [1], [0], [0], [0, 0, 1, 0], [], []>} : vector<8x16xbf16>, vector<8x16xbf16>, vector<8x8xf32> -> vector<8x8xf32>
    %cst_39 = arith.constant dense<0xFF800000> : vector<8xf32>
    %85 = vector.multi_reduction <maximumf>, %84, %cst_39 [1] : vector<8x8xf32> to vector<8xf32>
    %86 = vector.shape_cast %85 : vector<8xf32> to vector<8x1xf32>
    %87 = vector.broadcast %86 : vector<8x1xf32> to vector<8x8xf32>
    %88 = arith.subf %84, %87 : vector<8x8xf32>
    %89 = math.exp %88 : vector<8x8xf32>
    %cst_40 = arith.constant dense<0.000000e+00> : vector<8xf32>
    %90 = vector.multi_reduction <add>, %89, %cst_40 [1] : vector<8x8xf32> to vector<8xf32>
    %91 = vector.shape_cast %90 : vector<8xf32> to vector<8x1xf32>
    %92 = tpu.reciprocal %91 {approx = true} : vector<8x1xf32> -> vector<8x1xf32>
    %93 = vector.broadcast %92 : vector<8x1xf32> to vector<8x8xf32>
    %94 = arith.mulf %89, %93 : vector<8x8xf32>
    %95 = arith.truncf %94 : vector<8x8xf32> to vector<8x8xbf16>
    %cst_41 = arith.constant dense<0.000000e+00> : vector<8x16xf32>
    %96 = tpu.matmul %95, %83, %cst_41 {dimension_numbers = #tpu.dot_dimension_numbers<[1], [0], [0], [1], [0, 0, 1, 1], [], []>} : vector<8x8xbf16>, vector<8x16xbf16>, vector<8x16xf32> -> vector<8x16xf32>
    %97 = arith.truncf %96 : vector<8x16xf32> to vector<8x16xbf16>
    %c0_42 = arith.constant 0 : index
    %c48 = arith.constant 48 : index
    %98 = vector.load %arg13[%c0_42, %c48] : memref<8x64xbf16, #tpu.memory_space<vmem>>, vector<8x16xbf16>
    tpu.vector_store %arg13[%c0_42, %c48], %97 {strides = array<i32>} : memref<8x64xbf16, #tpu.memory_space<vmem>>, vector<8x16xbf16>,
    %c0_43 = arith.constant 0 : index
    %c0_44 = arith.constant 0 : index
    %99 = vector.load %arg13[%c0_43, %c0_44] : memref<8x64xbf16, #tpu.memory_space<vmem>>, vector<8x64xbf16>
    %c0_45 = arith.constant 0 : index
    %c0_46 = arith.constant 0 : index
    %100 = vector.load %arg10[%c0_45, %c0_46] : memref<64x32xbf16, #tpu.memory_space<vmem>>, vector<64x32xbf16>
    %cst_47 = arith.constant dense<0.000000e+00> : vector<8x32xf32>
    %101 = tpu.matmul %99, %100, %cst_47 {dimension_numbers = #tpu.dot_dimension_numbers<[1], [0], [0], [1], [0, 0, 1, 1], [], []>} : vector<8x64xbf16>, vector<64x32xbf16>, vector<8x32xf32> -> vector<8x32xf32>
    %c0_48 = arith.constant 0 : index
    %c0_49 = arith.constant 0 : index
    %102 = vector.load %arg11[%c0_48, %c0_49] : memref<1x32xf32, #tpu.memory_space<vmem>>, vector<1x32xf32>
    %103 = vector.broadcast %102 : vector<1x32xf32> to vector<8x32xf32>
    %104 = arith.addf %101, %103 : vector<8x32xf32>
    %105 = vector.shape_cast %104 : vector<8x32xf32> to vector<1x8x32xf32>
    %c0_50 = arith.constant 0 : index
    %c0_51 = arith.constant 0 : index
    %c0_52 = arith.constant 0 : index
    %106 = vector.load %arg12[%c0_50, %c0_51, %c0_52] : memref<1x8x32xf32, #tpu.memory_space<vmem>>, vector<1x8x32xf32>
    tpu.vector_store %arg12[%c0_50, %c0_51, %c0_52], %105 {strides = array<i32>} : memref<1x8x32xf32, #tpu.memory_space<vmem>>, vector<1x8x32xf32>,
    return
  }
  func.func @transform_0(%arg0: i32) -> (i32, i32, i32) {
    %c0_i32 = arith.constant 0 : i32
    %c0_i32_0 = arith.constant 0 : i32
    %c0_i32_1 = arith.constant 0 : i32
    return %arg0, %c0_i32, %c0_i32_0 : i32, i32, i32
  }
  func.func @transform_1(%arg0: i32) -> (i32, i32, i32) {
    %c0_i32 = arith.constant 0 : i32
    %c0_i32_0 = arith.constant 0 : i32
    %c0_i32_1 = arith.constant 0 : i32
    return %arg0, %c0_i32, %c0_i32_0 : i32, i32, i32
  }
  func.func @transform_2(%arg0: i32) -> (i32, i32, i32) {
    %c0_i32 = arith.constant 0 : i32
    %c0_i32_0 = arith.constant 0 : i32
    %c0_i32_1 = arith.constant 0 : i32
    return %arg0, %c0_i32, %c0_i32_0 : i32, i32, i32
  }
  func.func @transform_3(%arg0: i32) -> (i32, i32) {
    %c0_i32 = arith.constant 0 : i32
    %c0_i32_0 = arith.constant 0 : i32
    %c0_i32_1 = arith.constant 0 : i32
    return %c0_i32, %c0_i32_0 : i32, i32
  }
  func.func @transform_4(%arg0: i32) -> (i32, i32) {
    %c0_i32 = arith.constant 0 : i32
    %c0_i32_0 = arith.constant 0 : i32
    %c0_i32_1 = arith.constant 0 : i32
    return %c0_i32, %c0_i32_0 : i32, i32
  }
  func.func @transform_5(%arg0: i32) -> (i32, i32) {
    %c0_i32 = arith.constant 0 : i32
    %c0_i32_0 = arith.constant 0 : i32
    %c0_i32_1 = arith.constant 0 : i32
    return %c0_i32, %c0_i32_0 : i32, i32
  }
  func.func @transform_6(%arg0: i32) -> (i32, i32) {
    %c0_i32 = arith.constant 0 : i32
    %c0_i32_0 = arith.constant 0 : i32
    %c0_i32_1 = arith.constant 0 : i32
    return %c0_i32, %c0_i32_0 : i32, i32
  }
  func.func @transform_7(%arg0: i32) -> (i32, i32) {
    %c0_i32 = arith.constant 0 : i32
    %c0_i32_0 = arith.constant 0 : i32
    %c0_i32_1 = arith.constant 0 : i32
    return %c0_i32, %c0_i32_0 : i32, i32
  }
  func.func @transform_8(%arg0: i32) -> (i32, i32) {
    %c0_i32 = arith.constant 0 : i32
    %c0_i32_0 = arith.constant 0 : i32
    %c0_i32_1 = arith.constant 0 : i32
    return %c0_i32, %c0_i32_0 : i32, i32
  }
  func.func @transform_9(%arg0: i32) -> (i32, i32) {
    %c0_i32 = arith.constant 0 : i32
    %c0_i32_0 = arith.constant 0 : i32
    %c0_i32_1 = arith.constant 0 : i32
    return %c0_i32, %c0_i32_0 : i32, i32
  }
  func.func @transform_10(%arg0: i32) -> (i32, i32) {
    %c0_i32 = arith.constant 0 : i32
    %c0_i32_0 = arith.constant 0 : i32
    %c0_i32_1 = arith.constant 0 : i32
    return %c0_i32, %c0_i32_0 : i32, i32
  }
  func.func @transform_11(%arg0: i32) -> (i32, i32, i32) {
    %c0_i32 = arith.constant 0 : i32
    %c0_i32_0 = arith.constant 0 : i32
    %c0_i32_1 = arith.constant 0 : i32
    return %arg0, %c0_i32, %c0_i32_0 : i32, i32, i32
  }
}

</mosaic_0001>

<llo_original>
// kernel: tpu_custom_call.1
$region0: #{tpu_custom_call.1}
  #allocation0 [shape = 'u32[]', space=smem, size = 0x4, offset = 0x4, fixed_abs, tag = 'smem constant byte address 0x4 - core index']
  #allocation1 [shape = 'u32[144,128]{1,0:T(1,128)}', space=vmem, size = 0x12000, scoped, tag = 'internal scratch']
  #allocation2 [shape = 'bf16[8,64]{1,0:T(8,128)(2,1)}', space=vmem, size = 0x800, scoped, tag = 'scratch operand']
  %s0 = inlined_call_operand.vmem [shape: f32[2,8,32], index: 0, kind: input, shape index: {}]
  %s1 = inlined_call_operand.vmem [shape: f32[2,8,32], index: 1, kind: input, shape index: {}]
  %s2 = inlined_call_operand.vmem [shape: f32[2,8,32], index: 2, kind: input, shape index: {}]
  %s3 = inlined_call_operand.hbm [shape: bf16[32,64], index: 3, kind: input, shape index: {}]
  %s4 = inlined_call_operand.vmem [shape: f32[1,64], index: 4, kind: input, shape index: {}]
  %s5 = inlined_call_operand.hbm [shape: bf16[32,64], index: 5, kind: input, shape index: {}]
  %s6 = inlined_call_operand.vmem [shape: f32[1,64], index: 6, kind: input, shape index: {}]
  %s7 = inlined_call_operand.hbm [shape: bf16[32,64], index: 7, kind: input, shape index: {}]
  %s8 = inlined_call_operand.vmem [shape: f32[1,64], index: 8, kind: input, shape index: {}]
  %s9 = inlined_call_operand.vmem [shape: bf16[64,32], index: 9, kind: input, shape index: {}]
  %s10 = inlined_call_operand.vmem [shape: f32[1,32], index: 10, kind: input, shape index: {}]
  %s11 = inlined_call_operand.hbm [shape: f32[2,8,32], index: 11, kind: output, shape index: {}]
  %s12 = sld [smem:[#allocation0]]
  $region89: #{tpu_custom_call.1} parent=0
    _
  %s14 = ssub.s32 1, %s12
  %s15 = scalar_select 0, %s14, %s12
  $region1: #{tpu_custom_call.1} parent=0
    #allocation3 [shape = 'u8[8192]{0}', space=vmem, size = 0x2000, scoped, tag = 'input window, operand 3, single buffered']
    #allocation4 [shape = 's32[2]{0}', space=sflag, size = 0x8, scoped, tag = 'scoped memory for tpu_custom_call.1']
    #allocation5 [shape = 's32[2]{0}', space=sflag, size = 0x8, scoped, tag = 'scoped memory for tpu_custom_call.1']
    #allocation6 [shape = 'u8[8192]{0}', space=vmem, size = 0x2000, scoped, tag = 'input window, operand 5, single buffered']
    #allocation7 [shape = 's32[1]{0}', space=sflag, size = 0x4, scoped, tag = 'scoped memory for tpu_custom_call.1']
    #allocation8 [shape = 'u8[8192]{0}', space=vmem, size = 0x2000, scoped, tag = 'input window, operand 7, single buffered']
    #allocation9 [shape = 'u8[8192]{0}', space=vmem, size = 0x2000, scoped, tag = 'output window, operand 0']
    %16 = vsyncpa [#allocation4], 0
    %17 = vsyncpa [#allocation7], 0
    %18 = vsyncpa [#allocation5], 0
    %s19 = scalar_lea.sflag [#allocation5], 1
    %20 = vsyncpa %s19, 0
    loop: start=0, step=1, limit=4
    $region2: #{tpu_custom_call.1} parent=1 // loop_pre_header
      _
    $region3: #{tpu_custom_call.1} parent=1 // loop_header
      %s22 = sphi 0, %s26
      %p23 = scmp.ge.s32.totalorder %s22, 4
      %s32 = sphi 0, %s34
      %s35 = sphi 0, %s32
      %s36 = sphi 0, %s35
      %s52 = sphi 0, %s36
      %s58 = sphi 0, %s60
      %s61 = sphi 0, %s58
      %s62 = sphi 0, %s61
      %s78 = sphi 0, %s62
      %s84 = sphi 0, %s86
      %s87 = sphi 0, %s84
      %s88 = sphi 0, %s87
      %s104 = sphi 0, %s88
      %s108 = sphi 0, %s108
      %s110 = sphi 0, %s108
      %s111 = sphi 0, %s110
      %s125 = sphi 0, %s111
      %s129 = sphi 0, %s129
      %s131 = sphi 0, %s129
      %s132 = sphi 0, %s131
      %s146 = sphi 0, %s132
      %s150 = sphi 0, %s150
      %s152 = sphi 0, %s150
      %s153 = sphi 0, %s152
      %s167 = sphi 0, %s153
      %s171 = sphi 0, %s171
      %s173 = sphi 0, %s171
      %s174 = sphi 0, %s173
      %s188 = sphi 0, %s174
      %s192 = sphi 0, %s192
      %s194 = sphi 0, %s192
      %s195 = sphi 0, %s194
      %s209 = sphi 0, %s195
      %s213 = sphi 0, %s213
      %s215 = sphi 0, %s213
      %s216 = sphi 0, %s215
      %s230 = sphi 0, %s216
      %s234 = sphi 0, %s234
      %s236 = sphi 0, %s234
      %s237 = sphi 0, %s236
      %s251 = sphi 0, %s237
      %s255 = sphi 0, %s255
      %s257 = sphi 0, %s255
      %s258 = sphi 0, %s257
      %s272 = sphi 0, %s258
      %s278 = sphi 0, %s280
      %s281 = sphi 0, %s278
      %s282 = sphi 0, %s281
      %s298 = sphi 0, %s282
    $region4: #{tpu_custom_call.1} parent=1 // loop_header_branch
      %25 = sbr.rel (%p23) target = $region8
    $region5: #{tpu_custom_call.1} parent=1 // loop_body
      %s27 = ssub.s32 %s22, 1
      %s28 = ssub.s32 %s22, 2
      %s29 = sadd.s32 %s22, 1
      %s30 = ssub.s32 %s22, %s29
      %p31 = scmp.eq.s32.totalorder %s30, 0
      %s33 = sadd.s32 %s32, 1
      %s34 = scalar_select %p31, %s32, %s33
      %p37 = pneg %p31
      %p38 = scmp.eq.s32.totalorder %s22, 1
      %p39 = por %p37, %p38
      %p40 = scmp.ne.s32.totalorder %s32, %s35
      %p41 = scmp.eq.s32.totalorder %s22, 0
      %p42 = por %p40, %p41
      %p43 = scmp.ne.s32.totalorder %s32, %s35
      %p44 = scmp.eq.s32.totalorder %s27, 1
      %p45 = por %p43, %p44
      %p46 = scmp.ne.s32.totalorder %s35, %s36
      %p47 = scmp.eq.s32.totalorder %s27, 0
      %p48 = por %p46, %p47
      %p49 = scmp.ne.s32.totalorder %s35, %s36
      %p50 = scmp.eq.s32.totalorder %s28, 1
      %p51 = por %p49, %p50
      %p53 = scmp.ne.s32.totalorder %s36, %s52
      %p54 = scmp.eq.s32.totalorder %s28, 0
      %p55 = por %p53, %p54
      %s56 = ssub.s32 %s22, %s29
      %p57 = scmp.eq.s32.totalorder %s56, 0
      %s59 = sadd.s32 %s58, 1
      %s60 = scalar_select %p57, %s58, %s59
      %p63 = pneg %p57
      %p64 = scmp.eq.s32.totalorder %s22, 1
      %p65 = por %p63, %p64
      %p66 = scmp.ne.s32.totalorder %s58, %s61
      %p67 = scmp.eq.s32.totalorder %s22, 0
      %p68 = por %p66, %p67
      %p69 = scmp.ne.s32.totalorder %s58, %s61
      %p70 = scmp.eq.s32.totalorder %s27, 1
      %p71 = por %p69, %p70
      %p72 = scmp.ne.s32.totalorder %s61, %s62
      %p73 = scmp.eq.s32.totalorder %s27, 0
      %p74 = por %p72, %p73
      %p75 = scmp.ne.s32.totalorder %s61, %s62
      %p76 = scmp.eq.s32.totalorder %s28, 1
      %p77 = por %p75, %p76
      %p79 = scmp.ne.s32.totalorder %s62, %s78
      %p80 = scmp.eq.s32.totalorder %s28, 0
      %p81 = por %p79, %p80
      %s82 = ssub.s32 %s22, %s29
      %p83 = scmp.eq.s32.totalorder %s82, 0
      %s85 = sadd.s32 %s84, 1
      %s86 = scalar_select %p83, %s84, %s85
      %p89 = pneg %p83
      %p90 = scmp.eq.s32.totalorder %s22, 1
      %p91 = por %p89, %p90
      %p92 = scmp.ne.s32.totalorder %s84, %s87
      %p93 = scmp.eq.s32.totalorder %s22, 0
      %p94 = por %p92, %p93
      %p95 = scmp.ne.s32.totalorder %s84, %s87
      %p96 = scmp.eq.s32.totalorder %s27, 1
      %p97 = por %p95, %p96
      %p98 = scmp.ne.s32.totalorder %s87, %s88
      %p99 = scmp.eq.s32.totalorder %s27, 0
      %p100 = por %p98, %p99
      %p101 = scmp.ne.s32.totalorder %s87, %s88
      %p102 = scmp.eq.s32.totalorder %s28, 1
      %p103 = por %p101, %p102
      %p105 = scmp.ne.s32.totalorder %s88, %s104
      %p106 = scmp.eq.s32.totalorder %s28, 0
      %p107 = por %p105, %p106
      %s109 = sadd.s32 %s108, 1
      %p112 = scmp.eq.s32.totalorder %s22, 1
      %p113 = scmp.ne.s32.totalorder %s108, %s110
      %p114 = scmp.eq.s32.totalorder %s22, 0
      %p115 = por %p113, %p114
      %p116 = scmp.ne.s32.totalorder %s108, %s110
      %p117 = scmp.eq.s32.totalorder %s27, 1
      %p118 = por %p116, %p117
      %p119 = scmp.ne.s32.totalorder %s110, %s111
      %p120 = scmp.eq.s32.totalorder %s27, 0
      %p121 = por %p119, %p120
      %p122 = scmp.ne.s32.totalorder %s110, %s111
      %p123 = scmp.eq.s32.totalorder %s28, 1
      %p124 = por %p122, %p123
      %p126 = scmp.ne.s32.totalorder %s111, %s125
      %p127 = scmp.eq.s32.totalorder %s28, 0
      %p128 = por %p126, %p127
      %s130 = sadd.s32 %s129, 1
      %p133 = scmp.eq.s32.totalorder %s22, 1
      %p134 = scmp.ne.s32.totalorder %s129, %s131
      %p135 = scmp.eq.s32.totalorder %s22, 0
      %p136 = por %p134, %p135
      %p137 = scmp.ne.s32.totalorder %s129, %s131
      %p138 = scmp.eq.s32.totalorder %s27, 1
      %p139 = por %p137, %p138
      %p140 = scmp.ne.s32.totalorder %s131, %s132
      %p141 = scmp.eq.s32.totalorder %s27, 0
      %p142 = por %p140, %p141
      %p143 = scmp.ne.s32.totalorder %s131, %s132
      %p144 = scmp.eq.s32.totalorder %s28, 1
      %p145 = por %p143, %p144
      %p147 = scmp.ne.s32.totalorder %s132, %s146
      %p148 = scmp.eq.s32.totalorder %s28, 0
      %p149 = por %p147, %p148
      %s151 = sadd.s32 %s150, 1
      %p154 = scmp.eq.s32.totalorder %s22, 1
      %p155 = scmp.ne.s32.totalorder %s150, %s152
      %p156 = scmp.eq.s32.totalorder %s22, 0
      %p157 = por %p155, %p156
      %p158 = scmp.ne.s32.totalorder %s150, %s152
      %p159 = scmp.eq.s32.totalorder %s27, 1
      %p160 = por %p158, %p159
      %p161 = scmp.ne.s32.totalorder %s152, %s153
      %p162 = scmp.eq.s32.totalorder %s27, 0
      %p163 = por %p161, %p162
      %p164 = scmp.ne.s32.totalorder %s152, %s153
      %p165 = scmp.eq.s32.totalorder %s28, 1
      %p166 = por %p164, %p165
      %p168 = scmp.ne.s32.totalorder %s153, %s167
      %p169 = scmp.eq.s32.totalorder %s28, 0
      %p170 = por %p168, %p169
      %s172 = sadd.s32 %s171, 1
      %p175 = scmp.eq.s32.totalorder %s22, 1
      %p176 = scmp.ne.s32.totalorder %s171, %s173
      %p177 = scmp.eq.s32.totalorder %s22, 0
      %p178 = por %p176, %p177
      %p179 = scmp.ne.s32.totalorder %s171, %s173
      %p180 = scmp.eq.s32.totalorder %s27, 1
      %p181 = por %p179, %p180
      %p182 = scmp.ne.s32.totalorder %s173, %s174
      %p183 = scmp.eq.s32.totalorder %s27, 0
      %p184 = por %p182, %p183
      %p185 = scmp.ne.s32.totalorder %s173, %s174
      %p186 = scmp.eq.s32.totalorder %s28, 1
      %p187 = por %p185, %p186
      %p189 = scmp.ne.s32.totalorder %s174, %s188
      %p190 = scmp.eq.s32.totalorder %s28, 0
      %p191 = por %p189, %p190
      %s193 = sadd.s32 %s192, 1
      %p196 = scmp.eq.s32.totalorder %s22, 1
      %p197 = scmp.ne.s32.totalorder %s192, %s194
      %p198 = scmp.eq.s32.totalorder %s22, 0
      %p199 = por %p197, %p198
      %p200 = scmp.ne.s32.totalorder %s192, %s194
      %p201 = scmp.eq.s32.totalorder %s27, 1
      %p202 = por %p200, %p201
      %p203 = scmp.ne.s32.totalorder %s194, %s195
      %p204 = scmp.eq.s32.totalorder %s27, 0
      %p205 = por %p203, %p204
      %p206 = scmp.ne.s32.totalorder %s194, %s195
      %p207 = scmp.eq.s32.totalorder %s28, 1
      %p208 = por %p206, %p207
      %p210 = scmp.ne.s32.totalorder %s195, %s209
      %p211 = scmp.eq.s32.totalorder %s28, 0
      %p212 = por %p210, %p211
      %s214 = sadd.s32 %s213, 1
      %p217 = scmp.eq.s32.totalorder %s22, 1
      %p218 = scmp.ne.s32.totalorder %s213, %s215
      %p219 = scmp.eq.s32.totalorder %s22, 0
      %p220 = por %p218, %p219
      %p221 = scmp.ne.s32.totalorder %s213, %s215
      %p222 = scmp.eq.s32.totalorder %s27, 1
      %p223 = por %p221, %p222
      %p224 = scmp.ne.s32.totalorder %s215, %s216
      %p225 = scmp.eq.s32.totalorder %s27, 0
      %p226 = por %p224, %p225
      %p227 = scmp.ne.s32.totalorder %s215, %s216
      %p228 = scmp.eq.s32.totalorder %s28, 1
      %p229 = por %p227, %p228
      %p231 = scmp.ne.s32.totalorder %s216, %s230
      %p232 = scmp.eq.s32.totalorder %s28, 0
      %p233 = por %p231, %p232
      %s235 = sadd.s32 %s234, 1
      %p238 = scmp.eq.s32.totalorder %s22, 1
      %p239 = scmp.ne.s32.totalorder %s234, %s236
      %p240 = scmp.eq.s32.totalorder %s22, 0
      %p241 = por %p239, %p240
      %p242 = scmp.ne.s32.totalorder %s234, %s236
      %p243 = scmp.eq.s32.totalorder %s27, 1
      %p244 = por %p242, %p243
      %p245 = scmp.ne.s32.totalorder %s236, %s237
      %p246 = scmp.eq.s32.totalorder %s27, 0
      %p247 = por %p245, %p246
      %p248 = scmp.ne.s32.totalorder %s236, %s237
      %p249 = scmp.eq.s32.totalorder %s28, 1
      %p250 = por %p248, %p249
      %p252 = scmp.ne.s32.totalorder %s237, %s251
      %p253 = scmp.eq.s32.totalorder %s28, 0
      %p254 = por %p252, %p253
      %s256 = sadd.s32 %s255, 1
      %p259 = scmp.eq.s32.totalorder %s22, 1
      %p260 = scmp.ne.s32.totalorder %s255, %s257
      %p261 = scmp.eq.s32.totalorder %s22, 0
      %p262 = por %p260, %p261
      %p263 = scmp.ne.s32.totalorder %s255, %s257
      %p264 = scmp.eq.s32.totalorder %s27, 1
      %p265 = por %p263, %p264
      %p266 = scmp.ne.s32.totalorder %s257, %s258
      %p267 = scmp.eq.s32.totalorder %s27, 0
      %p268 = por %p266, %p267
      %p269 = scmp.ne.s32.totalorder %s257, %s258
      %p270 = scmp.eq.s32.totalorder %s28, 1
      %p271 = por %p269, %p270
      %p273 = scmp.ne.s32.totalorder %s258, %s272
      %p274 = scmp.eq.s32.totalorder %s28, 0
      %p275 = por %p273, %p274
      %s276 = ssub.s32 %s22, %s29
      %p277 = scmp.eq.s32.totalorder %s276, 0
      %s279 = sadd.s32 %s278, 1
      %s280 = scalar_select %p277, %s278, %s279
      %p283 = pneg %p277
      %p284 = scmp.eq.s32.totalorder %s22, 1
      %p285 = por %p283, %p284
      %p286 = scmp.ne.s32.totalorder %s278, %s281
      %p287 = scmp.eq.s32.totalorder %s22, 0
      %p288 = por %p286, %p287
      %p289 = scmp.ne.s32.totalorder %s278, %s281
      %p290 = scmp.eq.s32.totalorder %s27, 1
      %p291 = por %p289, %p290
      %p292 = scmp.ne.s32.totalorder %s281, %s282
      %p293 = scmp.eq.s32.totalorder %s27, 0
      %p294 = por %p292, %p293
      %p295 = scmp.ne.s32.totalorder %s281, %s282
      %p296 = scmp.eq.s32.totalorder %s28, 1
      %p297 = por %p295, %p296
      %p299 = scmp.ne.s32.totalorder %s282, %s298
      %p300 = scmp.eq.s32.totalorder %s28, 0
      %p301 = por %p299, %p300
      %p302 = scmp.le.s32.totalorder 1, %s22
      %p303 = scmp.lt.s32.totalorder %s22, 3
      %p304 = pnand %p302, %p303
      %p305 = pneg %p304
      // Predicated region
      $region9: #{tpu_custom_call.1} parent=5 // pred_check
        _
      $region10: #{tpu_custom_call.1} parent=5 // pred_check_branch
        %307 = sbr.rel (%p304) target = $region12
      $region11: #{tpu_custom_call.1} parent=5 // pred_region
        %s308 = ssub.s32 %s22, 1
        // Predicated region
        $region13: #{tpu_custom_call.1} parent=11 // pred_check
          %p309 = pneg %p121
        $region14: #{tpu_custom_call.1} parent=11 // pred_check_branch
          %311 = sbr.rel (%p309) target = $region16
        $region15: #{tpu_custom_call.1} parent=11 // pred_region
          %s313 = ssub.s32 256, 256
          %314 = vsyncadd [#allocation4], %s313
          %s315 = sshll.u32 [#allocation3], 4
          %s316 = int_to_ptr.vmem [resolvable:$true] %s315
          %321 = dma.hbm_to_vmem [thread:$0]  %s3, 256, %s316, [#allocation4], 64, 64, 4
        $region16: #{tpu_custom_call.1} parent=11 // pred_fallthru
          _
        // Predicated region
        $region17: #{tpu_custom_call.1} parent=11 // pred_check
          %p322 = pneg %p142
        $region18: #{tpu_custom_call.1} parent=11 // pred_check_branch
          %324 = sbr.rel (%p322) target = $region20
        $region19: #{tpu_custom_call.1} parent=11 // pred_region
          _
        $region20: #{tpu_custom_call.1} parent=11 // pred_fallthru
          _
        // Predicated region
        $region21: #{tpu_custom_call.1} parent=11 // pred_check
          %p325 = pneg %p163
        $region22: #{tpu_custom_call.1} parent=11 // pred_check_branch
          %327 = sbr.rel (%p325) target = $region24
        $region23: #{tpu_custom_call.1} parent=11 // pred_region
          %s329 = ssub.s32 256, 256
          %330 = vsyncadd [#allocation7], %s329
          %s331 = sshll.u32 [#allocation6], 4
          %s332 = int_to_ptr.vmem [resolvable:$true] %s331
          %337 = dma.hbm_to_vmem [thread:$0]  %s5, 256, %s332, [#allocation7], 64, 64, 4
        $region24: #{tpu_custom_call.1} parent=11 // pred_fallthru
          _
        // Predicated region
        $region25: #{tpu_custom_call.1} parent=11 // pred_check
          %p338 = pneg %p184
        $region26: #{tpu_custom_call.1} parent=11 // pred_check_branch
          %340 = sbr.rel (%p338) target = $region28
        $region27: #{tpu_custom_call.1} parent=11 // pred_region
          _
        $region28: #{tpu_custom_call.1} parent=11 // pred_fallthru
          _
        // Predicated region
        $region29: #{tpu_custom_call.1} parent=11 // pred_check
          %p341 = pneg %p205
        $region30: #{tpu_custom_call.1} parent=11 // pred_check_branch
          %343 = sbr.rel (%p341) target = $region32
        $region31: #{tpu_custom_call.1} parent=11 // pred_region
          %s345 = ssub.s32 256, 256
          %346 = vsyncadd [#allocation7], %s345
          %s347 = sshll.u32 [#allocation8], 4
          %s348 = int_to_ptr.vmem [resolvable:$true] %s347
          %353 = dma.hbm_to_vmem [thread:$0]  %s7, 256, %s348, [#allocation7], 64, 64, 4
        $region32: #{tpu_custom_call.1} parent=11 // pred_fallthru
          _
        // Predicated region
        $region33: #{tpu_custom_call.1} parent=11 // pred_check
          %p354 = pneg %p226
        $region34: #{tpu_custom_call.1} parent=11 // pred_check_branch
          %356 = sbr.rel (%p354) target = $region36
        $region35: #{tpu_custom_call.1} parent=11 // pred_region
          _
        $region36: #{tpu_custom_call.1} parent=11 // pred_fallthru
          _
        // Predicated region
        $region37: #{tpu_custom_call.1} parent=11 // pred_check
          %p357 = pneg %p247
        $region38: #{tpu_custom_call.1} parent=11 // pred_check_branch
          %359 = sbr.rel (%p357) target = $region40
        $region39: #{tpu_custom_call.1} parent=11 // pred_region
          _
        $region40: #{tpu_custom_call.1} parent=11 // pred_fallthru
          _
        // Predicated region
        $region41: #{tpu_custom_call.1} parent=11 // pred_check
          %p360 = pneg %p268
        $region42: #{tpu_custom_call.1} parent=11 // pred_check_branch
          %362 = sbr.rel (%p360) target = $region44
        $region43: #{tpu_custom_call.1} parent=11 // pred_region
          _
        $region44: #{tpu_custom_call.1} parent=11 // pred_fallthru
          _
      $region12: #{tpu_custom_call.1} parent=5 // pred_fallthru
        _
      %p363 = scmp.lt.s32.totalorder %s22, 2
      // Predicated region
      $region45: #{tpu_custom_call.1} parent=5 // pred_check
        %p364 = pneg %p363
      $region46: #{tpu_custom_call.1} parent=5 // pred_check_branch
        %366 = sbr.rel (%p364) target = $region48
      $region47: #{tpu_custom_call.1} parent=5 // pred_region
        // Predicated region
        $region49: #{tpu_custom_call.1} parent=47 // pred_check
          %p367 = pneg %p42
        $region50: #{tpu_custom_call.1} parent=47 // pred_check_branch
          %369 = sbr.rel (%p367) target = $region52
        $region51: #{tpu_custom_call.1} parent=47 // pred_region
          %p370 = scmp.lt.s32.totalorder %s22, 1
          %s371 = scalar_select %p370, %s22, 1
          %s372 = smul.addr %s371, 8
          %s373 = scalar_lea.vmem %s0, %s372
        $region52: #{tpu_custom_call.1} parent=47 // pred_fallthru
          _
        // Predicated region
        $region53: #{tpu_custom_call.1} parent=47 // pred_check
          %p374 = pneg %p68
        $region54: #{tpu_custom_call.1} parent=47 // pred_check_branch
          %376 = sbr.rel (%p374) target = $region56
        $region55: #{tpu_custom_call.1} parent=47 // pred_region
          %p377 = scmp.lt.s32.totalorder %s22, 1
          %s378 = scalar_select %p377, %s22, 1
          %s379 = smul.addr %s378, 8
          %s380 = scalar_lea.vmem %s1, %s379
        $region56: #{tpu_custom_call.1} parent=47 // pred_fallthru
          _
        // Predicated region
        $region57: #{tpu_custom_call.1} parent=47 // pred_check
          %p381 = pneg %p94
        $region58: #{tpu_custom_call.1} parent=47 // pred_check_branch
          %383 = sbr.rel (%p381) target = $region60
        $region59: #{tpu_custom_call.1} parent=47 // pred_region
          %p384 = scmp.lt.s32.totalorder %s22, 1
          %s385 = scalar_select %p384, %s22, 1
          %s386 = smul.addr %s385, 8
          %s387 = scalar_lea.vmem %s2, %s386
        $region60: #{tpu_custom_call.1} parent=47 // pred_fallthru
          _
      $region48: #{tpu_custom_call.1} parent=5 // pred_fallthru
        _
      %p388 = scmp.le.s32.totalorder 1, %s22
      %p389 = scmp.lt.s32.totalorder %s22, 3
      %p390 = pnand %p388, %p389
      %p391 = pneg %p390
      // Predicated region
      $region61: #{tpu_custom_call.1} parent=5 // pred_check
        _
      $region62: #{tpu_custom_call.1} parent=5 // pred_check_branch
        %393 = sbr.rel (%p390) target = $region64
      $region63: #{tpu_custom_call.1} parent=5 // pred_region
        %s394 = ssub.s32 %s22, 1
        // Predicated region
        $region65: #{tpu_custom_call.1} parent=63 // pred_check
          %p395 = pneg %p121
        $region66: #{tpu_custom_call.1} parent=63 // pred_check_branch
          %397 = sbr.rel (%p395) target = $region68
        $region67: #{tpu_custom_call.1} parent=63 // pred_region
          %398 = dma.done [#allocation4], 256
        $region68: #{tpu_custom_call.1} parent=63 // pred_fallthru
          _
        // Predicated region
        $region69: #{tpu_custom_call.1} parent=63 // pred_check
          %p399 = pneg %p163
        $region70: #{tpu_custom_call.1} parent=63 // pred_check_branch
          %401 = sbr.rel (%p399) target = $region72
        $region71: #{tpu_custom_call.1} parent=63 // pred_region
          %402 = dma.done [#allocation7], 256
        $region72: #{tpu_custom_call.1} parent=63 // pred_fallthru
          _
        // Predicated region
        $region73: #{tpu_custom_call.1} parent=63 // pred_check
          %p403 = pneg %p205
        $region74: #{tpu_custom_call.1} parent=63 // pred_check_branch
          %405 = sbr.rel (%p403) target = $region76
        $region75: #{tpu_custom_call.1} parent=63 // pred_region
          %406 = dma.done [#allocation7], 256
        $region76: #{tpu_custom_call.1} parent=63 // pred_fallthru
          _
        %p407 = scmp.lt.s32.totalorder %s27, 1
        %s408 = scalar_select %p407, %s27, 1
        %s409 = smul.addr %s408, 8
        %s410 = scalar_lea.vmem %s0, %s409
        %p411 = pneg %p48
        %p412 = pneg %p45
        %p413 = scmp.lt.s32.totalorder %s27, 1
        %s414 = scalar_select %p413, %s27, 1
        %s415 = smul.addr %s414, 8
        %s416 = scalar_lea.vmem %s1, %s415
        %p417 = pneg %p74
        %p418 = pneg %p71
        %p419 = scmp.lt.s32.totalorder %s27, 1
        %s420 = scalar_select %p419, %s27, 1
        %s421 = smul.addr %s420, 8
        %s422 = scalar_lea.vmem %s2, %s421
        %p423 = pneg %p100
        %p424 = pneg %p97
        %p425 = pneg %p121
        %p426 = pneg %p118
        %p427 = pneg %p142
        %p428 = pneg %p139
        %p429 = pneg %p163
        %p430 = pneg %p160
        %p431 = pneg %p184
        %p432 = pneg %p181
        %p433 = pneg %p205
        %p434 = pneg %p202
        %p435 = pneg %p226
        %p436 = pneg %p223
        %p437 = pneg %p247
        %p438 = pneg %p244
        %p439 = pneg %p268
        %p440 = pneg %p265
        %p441 = pneg %p294
        %p442 = pneg %p291
        %s443 = sand.u32 %s281, 1
        %s444 = scalar_lea.sflag [#allocation5], %s443
        %s445 = sand.u32 %s281, 1
        %s446 = smul.addr %s445, 8
        %s447 = scalar_lea.vmem [#allocation9], %s446
        %p448 = scmp.lt.s32.totalorder %s27, 1
        %s449 = scalar_select %p448, %s27, 1
        %s450 = smul.addr %s449, 8
        %s451 = scalar_lea.vmem %s0, %s450
        %p452 = scmp.lt.s32.totalorder %s27, 1
        %s453 = scalar_select %p452, %s27, 1
        %s454 = smul.addr %s453, 8
        %s455 = scalar_lea.vmem %s1, %s454
        %p456 = scmp.lt.s32.totalorder %s27, 1
        %s457 = scalar_select %p456, %s27, 1
        %s458 = smul.addr %s457, 8
        %s459 = scalar_lea.vmem %s2, %s458
        %v461 = vld [vmem:[%s451] sm:$0xff]
        %v462 = vpack.c.bf16 %v461, %v461
        %v463 = vld [vmem:[%s455] sm:$0xff]
        %v464 = vpack.c.bf16 %v463, %v463
        %v465 = vld [vmem:[%s459] sm:$0xff]
        %v466 = vpack.c.bf16 %v465, %v465
        %v467 = vld [vmem:[#allocation3] sm:$0xf]
        %v468 = vld [vmem:[#allocation3 + $0x4] sm:$0xf]
        %v469 = vld [vmem:[#allocation3 + $0x8] sm:$0xf]
        %v470 = vld [vmem:[#allocation3 + $0xc] sm:$0xf]
        %v471 = vld [vmem:[%s4] sm:$0x1]
        %v473 = vlaneseq
        %v474 = vshrl.u32 %v473, 7
        %v475 = vsub.s32 0, %v474
        %v476 = vrot.slane %v471, %v475
        %v482 = vunpack.c.l.b16 %v467
        %v483 = vunpack.c.l.b16 %v468
        %v484 = vunpack.c.l.b16 %v469
        %v485 = vunpack.c.l.b16 %v470
        %v486 = vpack.c.b16 %v483, %v482
        %v487 = vpack.c.b16 %v485, %v484
        %vm490 = vcmask 261120
        %v492 = vsel %vm490, %v462, 0
        %494 = vmatprep.subr.bf16.mxu0 0
        %495 = vmatpush1.bf16.msra.mxu0 %v486
        %496 = vmatprep.subr.bf16.mxu0 0
        %497 = vmatpush1.bf16.msra.mxu0 %v487
        %498 = vmatprep.subr.bf16.mxu0 0
        %499 = vmatpush1.bf16.msra.mxu0 0
        %500 = vmatprep.subr.bf16.mxu0 0
        %501 = vmatpush1.bf16.msra.mxu0 0
        %502 = vmatprep.subr.bf16.mxu0 0
        %503 = vmatpush1.bf16.msra.mxu0 0
        %504 = vmatprep.subr.bf16.mxu0 0
        %505 = vmatpush1.bf16.msra.mxu0 0
        %506 = vmatprep.subr.bf16.mxu0 0
        %507 = vmatpush1.bf16.msra.mxu0 0
        %508 = vmatprep.subr.bf16.mxu0 0
        %509 = vmatpush1.bf16.msra.mxu0 0
        %510 = vmatprep.subr.bf16.mxu0 0
        %511 = vmatpush1.bf16.msra.mxu0 0
        %512 = vmatprep.subr.bf16.mxu0 0
        %513 = vmatpush1.bf16.msra.mxu0 0
        %514 = vmatprep.subr.bf16.mxu0 0
        %515 = vmatpush1.bf16.msra.mxu0 0
        %516 = vmatprep.subr.bf16.mxu0 0
        %517 = vmatpush1.bf16.msra.mxu0 0
        %518 = vmatprep.subr.bf16.mxu0 0
        %519 = vmatpush1.bf16.msra.mxu0 0
        %520 = vmatprep.subr.bf16.mxu0 0
        %521 = vmatpush1.bf16.msra.mxu0 0
        %522 = vmatprep.subr.bf16.mxu0 0
        %523 = vmatpush1.bf16.msra.mxu0 0
        %524 = vmatprep.subr.bf16.mxu0 0
        %525 = vmatpush1.bf16.msra.mxu0 0
        %526 = vmatprep.mubr.bf16.mxu0 0
        %527 = vmatmul.mubr.bf16.gmra.mrb[0].mxu0 %v492
        %v528 = vpop.f32.mrb[0].mxu0
        %v529 = vadd.f32 %v476, %v528
        %v530 = vpop.f32.mrb[0].mxu0
        %v531 = vpop.f32.mrb[0].mxu0
        %v532 = vpop.f32.mrb[0].mxu0
        %533 = vdwg.mxu0
        %v534 = vpack.c.bf16 %v529, %v529
        %v535 = vld [vmem:[#allocation6] sm:$0xf]
        %v536 = vld [vmem:[#allocation6 + $0x4] sm:$0xf]
        %v537 = vld [vmem:[#allocation6 + $0x8] sm:$0xf]
        %v538 = vld [vmem:[#allocation6 + $0xc] sm:$0xf]
        %v539 = vld [vmem:[%s6] sm:$0x1]
        %v541 = vlaneseq
        %v542 = vshrl.u32 %v541, 7
        %v543 = vsub.s32 0, %v542
        %v544 = vrot.slane %v539, %v543
        %v550 = vunpack.c.l.b16 %v535
        %v551 = vunpack.c.l.b16 %v536
        %v552 = vunpack.c.l.b16 %v537
        %v553 = vunpack.c.l.b16 %v538
        %v554 = vpack.c.b16 %v551, %v550
        %v555 = vpack.c.b16 %v553, %v552
        %v559 = vsel %vm490, %v464, 0
        %561 = vmatprep.subr.bf16.mxu0 0
        %562 = vmatpush1.bf16.msra.mxu0 %v554
        %563 = vmatprep.subr.bf16.mxu0 0
        %564 = vmatpush1.bf16.msra.mxu0 %v555
        %565 = vmatprep.subr.bf16.mxu0 0
        %566 = vmatpush1.bf16.msra.mxu0 0
        %567 = vmatprep.subr.bf16.mxu0 0
        %568 = vmatpush1.bf16.msra.mxu0 0
        %569 = vmatprep.subr.bf16.mxu0 0
        %570 = vmatpush1.bf16.msra.mxu0 0
        %571 = vmatprep.subr.bf16.mxu0 0
        %572 = vmatpush1.bf16.msra.mxu0 0
        %573 = vmatprep.subr.bf16.mxu0 0
        %574 = vmatpush1.bf16.msra.mxu0 0
        %575 = vmatprep.subr.bf16.mxu0 0
        %576 = vmatpush1.bf16.msra.mxu0 0
        %577 = vmatprep.subr.bf16.mxu0 0
        %578 = vmatpush1.bf16.msra.mxu0 0
        %579 = vmatprep.subr.bf16.mxu0 0
        %580 = vmatpush1.bf16.msra.mxu0 0
        %581 = vmatprep.subr.bf16.mxu0 0
        %582 = vmatpush1.bf16.msra.mxu0 0
        %583 = vmatprep.subr.bf16.mxu0 0
        %584 = vmatpush1.bf16.msra.mxu0 0
        %585 = vmatprep.subr.bf16.mxu0 0
        %586 = vmatpush1.bf16.msra.mxu0 0
        %587 = vmatprep.subr.bf16.mxu0 0
        %588 = vmatpush1.bf16.msra.mxu0 0
        %589 = vmatprep.subr.bf16.mxu0 0
        %590 = vmatpush1.bf16.msra.mxu0 0
        %591 = vmatprep.subr.bf16.mxu0 0
        %592 = vmatpush1.bf16.msra.mxu0 0
        %593 = vmatprep.mubr.bf16.mxu0 0
        %594 = vmatmul.mubr.bf16.gmra.mrb[0].mxu0 %v559
        %v595 = vpop.f32.mrb[0].mxu0
        %v596 = vadd.f32 %v544, %v595
        %v597 = vpop.f32.mrb[0].mxu0
        %v598 = vpop.f32.mrb[0].mxu0
        %v599 = vpop.f32.mrb[0].mxu0
        %600 = vdwg.mxu0
        %v601 = vpack.c.bf16 %v596, %v596
        %v602 = vld [vmem:[#allocation8] sm:$0xf]
        %v603 = vld [vmem:[#allocation8 + $0x4] sm:$0xf]
        %v604 = vld [vmem:[#allocation8 + $0x8] sm:$0xf]
        %v605 = vld [vmem:[#allocation8 + $0xc] sm:$0xf]
        %v606 = vld [vmem:[%s8] sm:$0x1]
        %v608 = vlaneseq
        %v609 = vshrl.u32 %v608, 7
        %v610 = vsub.s32 0, %v609
        %v611 = vrot.slane %v606, %v610
        %v617 = vunpack.c.l.b16 %v602
        %v618 = vunpack.c.l.b16 %v603
        %v619 = vunpack.c.l.b16 %v604
        %v620 = vunpack.c.l.b16 %v605
        %v621 = vpack.c.b16 %v618, %v617
        %v622 = vpack.c.b16 %v620, %v619
        %v626 = vsel %vm490, %v466, 0
        %628 = vmatprep.subr.bf16.mxu0 0
        %629 = vmatpush1.bf16.msra.mxu0 %v621
        %630 = vmatprep.subr.bf16.mxu0 0
        %631 = vmatpush1.bf16.msra.mxu0 %v622
        %632 = vmatprep.subr.bf16.mxu0 0
        %633 = vmatpush1.bf16.msra.mxu0 0
        %634 = vmatprep.subr.bf16.mxu0 0
        %635 = vmatpush1.bf16.msra.mxu0 0
        %636 = vmatprep.subr.bf16.mxu0 0
        %637 = vmatpush1.bf16.msra.mxu0 0
        %638 = vmatprep.subr.bf16.mxu0 0
        %639 = vmatpush1.bf16.msra.mxu0 0
        %640 = vmatprep.subr.bf16.mxu0 0
        %641 = vmatpush1.bf16.msra.mxu0 0
        %642 = vmatprep.subr.bf16.mxu0 0
        %643 = vmatpush1.bf16.msra.mxu0 0
        %644 = vmatprep.subr.bf16.mxu0 0
        %645 = vmatpush1.bf16.msra.mxu0 0
        %646 = vmatprep.subr.bf16.mxu0 0
        %647 = vmatpush1.bf16.msra.mxu0 0
        %648 = vmatprep.subr.bf16.mxu0 0
        %649 = vmatpush1.bf16.msra.mxu0 0
        %650 = vmatprep.subr.bf16.mxu0 0
        %651 = vmatpush1.bf16.msra.mxu0 0
        %652 = vmatprep.subr.bf16.mxu0 0
        %653 = vmatpush1.bf16.msra.mxu0 0
        %654 = vmatprep.subr.bf16.mxu0 0
        %655 = vmatpush1.bf16.msra.mxu0 0
        %656 = vmatprep.subr.bf16.mxu0 0
        %657 = vmatpush1.bf16.msra.mxu0 0
        %658 = vmatprep.subr.bf16.mxu0 0
        %659 = vmatpush1.bf16.msra.mxu0 0
        %660 = vmatprep.mubr.bf16.mxu0 0
        %661 = vmatmul.mubr.bf16.gmra.mrb[0].mxu0 %v626
        %v662 = vpop.f32.mrb[0].mxu0
        %v663 = vadd.f32 %v611, %v662
        %v664 = vpop.f32.mrb[0].mxu0
        %v665 = vpop.f32.mrb[0].mxu0
        %v666 = vpop.f32.mrb[0].mxu0
        %667 = vdwg.mxu0
        %v668 = vpack.c.bf16 %v663, %v663
        %vm669 = vcmask 130048
        %v671 = vsel %vm669, %v534, 0
        %v674 = vsel %vm669, %v601, 0
        %676 = vmatprep.subr.bf16.mxu0 0
        %677 = vmatpush1.bf16.xpose.msra.mxu0 %v674
        %678 = vmatprep.subr.bf16.mxu0 0
        %679 = vmatpush1.bf16.xpose.msra.mxu0 0
        %680 = vmatprep.subr.bf16.mxu0 0
        %681 = vmatpush1.bf16.xpose.msra.mxu0 0
        %682 = vmatprep.subr.bf16.mxu0 0
        %683 = vmatpush1.bf16.xpose.msra.mxu0 0
        %684 = vmatprep.subr.bf16.mxu0 0
        %685 = vmatpush1.bf16.xpose.msra.mxu0 0
        %686 = vmatprep.subr.bf16.mxu0 0
        %687 = vmatpush1.bf16.xpose.msra.mxu0 0
        %688 = vmatprep.subr.bf16.mxu0 0
        %689 = vmatpush1.bf16.xpose.msra.mxu0 0
        %690 = vmatprep.subr.bf16.mxu0 0
        %691 = vmatpush1.bf16.xpose.msra.mxu0 0
        %692 = vmatprep.subr.bf16.mxu0 0
        %693 = vmatpush1.bf16.xpose.msra.mxu0 0
        %694 = vmatprep.subr.bf16.mxu0 0
        %695 = vmatpush1.bf16.xpose.msra.mxu0 0
        %696 = vmatprep.subr.bf16.mxu0 0
        %697 = vmatpush1.bf16.xpose.msra.mxu0 0
        %698 = vmatprep.subr.bf16.mxu0 0
        %699 = vmatpush1.bf16.xpose.msra.mxu0 0
        %700 = vmatprep.subr.bf16.mxu0 0
        %701 = vmatpush1.bf16.xpose.msra.mxu0 0
        %702 = vmatprep.subr.bf16.mxu0 0
        %703 = vmatpush1.bf16.xpose.msra.mxu0 0
        %704 = vmatprep.subr.bf16.mxu0 0
        %705 = vmatpush1.bf16.xpose.msra.mxu0 0
        %706 = vmatprep.subr.bf16.mxu0 0
        %707 = vmatpush1.bf16.xpose.msra.mxu0 0
        %708 = vmatprep.mubr.bf16.mxu0 0
        %709 = vmatmul.mubr.bf16.gmra.mrb[0].mxu0 %v671
        %v710 = vpop.f32.mrb[0].mxu0
        %v711 = vadd.f32 0.0, %v710
        %v712 = vpop.f32.mrb[0].mxu0
        %v713 = vpop.f32.mrb[0].mxu0
        %v714 = vpop.f32.mrb[0].mxu0
        %715 = vdwg.mxu0
        %vm716 = vcmask 64512
        %v717 = vsel %vm716, %v711, -inf
        %718 = vmax.xlane.f32.xlu0 %v717
        %v719 = vpop.xlane.xlu0 %718
        %v720 = vsub.f32 %v711, %v719
        %v721 = vmul.f32 %v720, 1.442695
        %v722 = vpow.pop %v721
        %v723 = vsel %vm716, %v722, 0.0
        %724 = vadd.xlane.f32.xlu0 %v723
        %v725 = vpop.xlane.xlu0 %724
        %v726 = vrcp.pop %v725
        %v727 = vmul.f32 %v722, %v726
        %v728 = vpack.c.bf16 %v727, %v727
        %v730 = vsel %vm716, %v728, 0
        %vm732 = vcmask 1043456
        %v734 = vsel %vm732, %v668, 0
        %736 = vmatprep.subr.bf16.mxu0 0
        %737 = vmatpush1.bf16.msra.mxu0 %v734
        %738 = vmatprep.subr.bf16.mxu0 0
        %739 = vmatpush1.bf16.msra.mxu0 0
        %740 = vmatprep.subr.bf16.mxu0 0
        %741 = vmatpush1.bf16.msra.mxu0 0
        %742 = vmatprep.subr.bf16.mxu0 0
        %743 = vmatpush1.bf16.msra.mxu0 0
        %744 = vmatprep.subr.bf16.mxu0 0
        %745 = vmatpush1.bf16.msra.mxu0 0
        %746 = vmatprep.subr.bf16.mxu0 0
        %747 = vmatpush1.bf16.msra.mxu0 0
        %748 = vmatprep.subr.bf16.mxu0 0
        %749 = vmatpush1.bf16.msra.mxu0 0
        %750 = vmatprep.subr.bf16.mxu0 0
        %751 = vmatpush1.bf16.msra.mxu0 0
        %752 = vmatprep.subr.bf16.mxu0 0
        %753 = vmatpush1.bf16.msra.mxu0 0
        %754 = vmatprep.subr.bf16.mxu0 0
        %755 = vmatpush1.bf16.msra.mxu0 0
        %756 = vmatprep.subr.bf16.mxu0 0
        %757 = vmatpush1.bf16.msra.mxu0 0
        %758 = vmatprep.subr.bf16.mxu0 0
        %759 = vmatpush1.bf16.msra.mxu0 0
        %760 = vmatprep.subr.bf16.mxu0 0
        %761 = vmatpush1.bf16.msra.mxu0 0
        %762 = vmatprep.subr.bf16.mxu0 0
        %763 = vmatpush1.bf16.msra.mxu0 0
        %764 = vmatprep.subr.bf16.mxu0 0
        %765 = vmatpush1.bf16.msra.mxu0 0
        %766 = vmatprep.subr.bf16.mxu0 0
        %767 = vmatpush1.bf16.msra.mxu0 0
        %768 = vmatprep.mubr.bf16.mxu0 0
        %769 = vmatmul.mubr.bf16.gmra.mrb[0].mxu0 %v730
        %v770 = vpop.f32.mrb[0].mxu0
        %v771 = vadd.f32 0.0, %v770
        %v772 = vpop.f32.mrb[0].mxu0
        %v773 = vpop.f32.mrb[0].mxu0
        %v774 = vpop.f32.mrb[0].mxu0
        %775 = vdwg.mxu0
        %v776 = vpack.c.bf16 %v771, %v771
        %vm777 = vcmask 125952
        %778 = vst.msk [vmem:[#allocation2] sm:$0xf] %vm777, %v776
        %780 = vrot.lane.b32.xlu0 %v534, 112
        %v781 = vpop.permute.xlu0 %780
        %783 = vrot.lane.b32.xlu0 %v601, 112
        %v784 = vpop.permute.xlu0 %783
        %v786 = vsel %vm669, %v781, 0
        %v789 = vsel %vm669, %v784, 0
        %791 = vmatprep.subr.bf16.mxu0 0
        %792 = vmatpush1.bf16.xpose.msra.mxu0 %v789
        %793 = vmatprep.subr.bf16.mxu0 0
        %794 = vmatpush1.bf16.xpose.msra.mxu0 0
        %795 = vmatprep.subr.bf16.mxu0 0
        %796 = vmatpush1.bf16.xpose.msra.mxu0 0
        %797 = vmatprep.subr.bf16.mxu0 0
        %798 = vmatpush1.bf16.xpose.msra.mxu0 0
        %799 = vmatprep.subr.bf16.mxu0 0
        %800 = vmatpush1.bf16.xpose.msra.mxu0 0
        %801 = vmatprep.subr.bf16.mxu0 0
        %802 = vmatpush1.bf16.xpose.msra.mxu0 0
        %803 = vmatprep.subr.bf16.mxu0 0
        %804 = vmatpush1.bf16.xpose.msra.mxu0 0
        %805 = vmatprep.subr.bf16.mxu0 0
        %806 = vmatpush1.bf16.xpose.msra.mxu0 0
        %807 = vmatprep.subr.bf16.mxu0 0
        %808 = vmatpush1.bf16.xpose.msra.mxu0 0
        %809 = vmatprep.subr.bf16.mxu0 0
        %810 = vmatpush1.bf16.xpose.msra.mxu0 0
        %811 = vmatprep.subr.bf16.mxu0 0
        %812 = vmatpush1.bf16.xpose.msra.mxu0 0
        %813 = vmatprep.subr.bf16.mxu0 0
        %814 = vmatpush1.bf16.xpose.msra.mxu0 0
        %815 = vmatprep.subr.bf16.mxu0 0
        %816 = vmatpush1.bf16.xpose.msra.mxu0 0
        %817 = vmatprep.subr.bf16.mxu0 0
        %818 = vmatpush1.bf16.xpose.msra.mxu0 0
        %819 = vmatprep.subr.bf16.mxu0 0
        %820 = vmatpush1.bf16.xpose.msra.mxu0 0
        %821 = vmatprep.subr.bf16.mxu0 0
        %822 = vmatpush1.bf16.xpose.msra.mxu0 0
        %823 = vmatprep.mubr.bf16.mxu0 0
        %824 = vmatmul.mubr.bf16.gmra.mrb[0].mxu0 %v786
        %v825 = vpop.f32.mrb[0].mxu0
        %v826 = vadd.f32 0.0, %v825
        %v827 = vpop.f32.mrb[0].mxu0
        %v828 = vpop.f32.mrb[0].mxu0
        %v829 = vpop.f32.mrb[0].mxu0
        %830 = vdwg.mxu0
        %v831 = vsel %vm716, %v826, -inf
        %832 = vmax.xlane.f32.xlu0 %v831
        %v833 = vpop.xlane.xlu0 %832
        %v834 = vsub.f32 %v826, %v833
        %v835 = vmul.f32 %v834, 1.442695
        %v836 = vpow.pop %v835
        %v837 = vsel %vm716, %v836, 0.0
        %838 = vadd.xlane.f32.xlu0 %v837
        %v839 = vpop.xlane.xlu0 %838
        %v840 = vrcp.pop %v839
        %v841 = vmul.f32 %v836, %v840
        %v842 = vpack.c.bf16 %v841, %v841
        %844 = vrot.lane.b32.xlu0 %v668, 112
        %v845 = vpop.permute.xlu0 %844
        %v847 = vsel %vm716, %v842, 0
        %v850 = vsel %vm732, %v845, 0
        %852 = vmatprep.subr.bf16.mxu0 0
        %853 = vmatpush1.bf16.msra.mxu0 %v850
        %854 = vmatprep.subr.bf16.mxu0 0
        %855 = vmatpush1.bf16.msra.mxu0 0
        %856 = vmatprep.subr.bf16.mxu0 0
        %857 = vmatpush1.bf16.msra.mxu0 0
        %858 = vmatprep.subr.bf16.mxu0 0
        %859 = vmatpush1.bf16.msra.mxu0 0
        %860 = vmatprep.subr.bf16.mxu0 0
        %861 = vmatpush1.bf16.msra.mxu0 0
        %862 = vmatprep.subr.bf16.mxu0 0
        %863 = vmatpush1.bf16.msra.mxu0 0
        %864 = vmatprep.subr.bf16.mxu0 0
        %865 = vmatpush1.bf16.msra.mxu0 0
        %866 = vmatprep.subr.bf16.mxu0 0
        %867 = vmatpush1.bf16.msra.mxu0 0
        %868 = vmatprep.subr.bf16.mxu0 0
        %869 = vmatpush1.bf16.msra.mxu0 0
        %870 = vmatprep.subr.bf16.mxu0 0
        %871 = vmatpush1.bf16.msra.mxu0 0
        %872 = vmatprep.subr.bf16.mxu0 0
        %873 = vmatpush1.bf16.msra.mxu0 0
        %874 = vmatprep.subr.bf16.mxu0 0
        %875 = vmatpush1.bf16.msra.mxu0 0
        %876 = vmatprep.subr.bf16.mxu0 0
        %877 = vmatpush1.bf16.msra.mxu0 0
        %878 = vmatprep.subr.bf16.mxu0 0
        %879 = vmatpush1.bf16.msra.mxu0 0
        %880 = vmatprep.subr.bf16.mxu0 0
        %881 = vmatpush1.bf16.msra.mxu0 0
        %882 = vmatprep.subr.bf16.mxu0 0
        %883 = vmatpush1.bf16.msra.mxu0 0
        %884 = vmatprep.mubr.bf16.mxu0 0
        %885 = vmatmul.mubr.bf16.gmra.mrb[0].mxu0 %v847
        %v886 = vpop.f32.mrb[0].mxu0
        %v887 = vadd.f32 0.0, %v886
        %v888 = vpop.f32.mrb[0].mxu0
        %v889 = vpop.f32.mrb[0].mxu0
        %v890 = vpop.f32.mrb[0].mxu0
        %891 = vdwg.mxu0
        %v892 = vpack.c.bf16 %v887, %v887
        %v894 = vunpack.c.l.b16 %v892
        %v895 = vpack.c.b16 %v894, %v894
        %896 = vrot.lane.b32.xlu0 %v895, 16
        %v897 = vpop.permute.xlu0 %896
        %vm899 = vcmask 257152
        %900 = vst.msk [vmem:[#allocation2] sm:$0xf] %vm899, %v897
        %901 = vrot.lane.b32.xlu0 %v534, 96
        %v902 = vpop.permute.xlu0 %901
        %903 = vrot.lane.b32.xlu0 %v601, 96
        %v904 = vpop.permute.xlu0 %903
        %v906 = vsel %vm669, %v902, 0
        %v909 = vsel %vm669, %v904, 0
        %911 = vmatprep.subr.bf16.mxu0 0
        %912 = vmatpush1.bf16.xpose.msra.mxu0 %v909
        %913 = vmatprep.subr.bf16.mxu0 0
        %914 = vmatpush1.bf16.xpose.msra.mxu0 0
        %915 = vmatprep.subr.bf16.mxu0 0
        %916 = vmatpush1.bf16.xpose.msra.mxu0 0
        %917 = vmatprep.subr.bf16.mxu0 0
        %918 = vmatpush1.bf16.xpose.msra.mxu0 0
        %919 = vmatprep.subr.bf16.mxu0 0
        %920 = vmatpush1.bf16.xpose.msra.mxu0 0
        %921 = vmatprep.subr.bf16.mxu0 0
        %922 = vmatpush1.bf16.xpose.msra.mxu0 0
        %923 = vmatprep.subr.bf16.mxu0 0
        %924 = vmatpush1.bf16.xpose.msra.mxu0 0
        %925 = vmatprep.subr.bf16.mxu0 0
        %926 = vmatpush1.bf16.xpose.msra.mxu0 0
        %927 = vmatprep.subr.bf16.mxu0 0
        %928 = vmatpush1.bf16.xpose.msra.mxu0 0
        %929 = vmatprep.subr.bf16.mxu0 0
        %930 = vmatpush1.bf16.xpose.msra.mxu0 0
        %931 = vmatprep.subr.bf16.mxu0 0
        %932 = vmatpush1.bf16.xpose.msra.mxu0 0
        %933 = vmatprep.subr.bf16.mxu0 0
        %934 = vmatpush1.bf16.xpose.msra.mxu0 0
        %935 = vmatprep.subr.bf16.mxu0 0
        %936 = vmatpush1.bf16.xpose.msra.mxu0 0
        %937 = vmatprep.subr.bf16.mxu0 0
        %938 = vmatpush1.bf16.xpose.msra.mxu0 0
        %939 = vmatprep.subr.bf16.mxu0 0
        %940 = vmatpush1.bf16.xpose.msra.mxu0 0
        %941 = vmatprep.subr.bf16.mxu0 0
        %942 = vmatpush1.bf16.xpose.msra.mxu0 0
        %943 = vmatprep.mubr.bf16.mxu0 0
        %944 = vmatmul.mubr.bf16.gmra.mrb[0].mxu0 %v906
        %v945 = vpop.f32.mrb[0].mxu0
        %v946 = vadd.f32 0.0, %v945
        %v947 = vpop.f32.mrb[0].mxu0
        %v948 = vpop.f32.mrb[0].mxu0
        %v949 = vpop.f32.mrb[0].mxu0
        %950 = vdwg.mxu0
        %v951 = vsel %vm716, %v946, -inf
        %952 = vmax.xlane.f32.xlu0 %v951
        %v953 = vpop.xlane.xlu0 %952
        %v954 = vsub.f32 %v946, %v953
        %v955 = vmul.f32 %v954, 1.442695
        %v956 = vpow.pop %v955
        %v957 = vsel %vm716, %v956, 0.0
        %958 = vadd.xlane.f32.xlu0 %v957
        %v959 = vpop.xlane.xlu0 %958
        %v960 = vrcp.pop %v959
        %v961 = vmul.f32 %v956, %v960
        %v962 = vpack.c.bf16 %v961, %v961
        %963 = vrot.lane.b32.xlu0 %v668, 96
        %v964 = vpop.permute.xlu0 %963
        %v966 = vsel %vm716, %v962, 0
        %v969 = vsel %vm732, %v964, 0
        %971 = vmatprep.subr.bf16.mxu0 0
        %972 = vmatpush1.bf16.msra.mxu0 %v969
        %973 = vmatprep.subr.bf16.mxu0 0
        %974 = vmatpush1.bf16.msra.mxu0 0
        %975 = vmatprep.subr.bf16.mxu0 0
        %976 = vmatpush1.bf16.msra.mxu0 0
        %977 = vmatprep.subr.bf16.mxu0 0
        %978 = vmatpush1.bf16.msra.mxu0 0
        %979 = vmatprep.subr.bf16.mxu0 0
        %980 = vmatpush1.bf16.msra.mxu0 0
        %981 = vmatprep.subr.bf16.mxu0 0
        %982 = vmatpush1.bf16.msra.mxu0 0
        %983 = vmatprep.subr.bf16.mxu0 0
        %984 = vmatpush1.bf16.msra.mxu0 0
        %985 = vmatprep.subr.bf16.mxu0 0
        %986 = vmatpush1.bf16.msra.mxu0 0
        %987 = vmatprep.subr.bf16.mxu0 0
        %988 = vmatpush1.bf16.msra.mxu0 0
        %989 = vmatprep.subr.bf16.mxu0 0
        %990 = vmatpush1.bf16.msra.mxu0 0
        %991 = vmatprep.subr.bf16.mxu0 0
        %992 = vmatpush1.bf16.msra.mxu0 0
        %993 = vmatprep.subr.bf16.mxu0 0
        %994 = vmatpush1.bf16.msra.mxu0 0
        %995 = vmatprep.subr.bf16.mxu0 0
        %996 = vmatpush1.bf16.msra.mxu0 0
        %997 = vmatprep.subr.bf16.mxu0 0
        %998 = vmatpush1.bf16.msra.mxu0 0
        %999 = vmatprep.subr.bf16.mxu0 0
        %1000 = vmatpush1.bf16.msra.mxu0 0
        %1001 = vmatprep.subr.bf16.mxu0 0
        %1002 = vmatpush1.bf16.msra.mxu0 0
        %1003 = vmatprep.mubr.bf16.mxu0 0
        %1004 = vmatmul.mubr.bf16.gmra.mrb[0].mxu0 %v966
        %v1005 = vpop.f32.mrb[0].mxu0
        %v1006 = vadd.f32 0.0, %v1005
        %v1007 = vpop.f32.mrb[0].mxu0
        %v1008 = vpop.f32.mrb[0].mxu0
        %v1009 = vpop.f32.mrb[0].mxu0
        %1010 = vdwg.mxu0
        %v1011 = vpack.c.bf16 %v1006, %v1006
        %v1013 = vunpack.c.l.b16 %v1011
        %v1014 = vpack.c.b16 %v1013, %v1013
        %1015 = vrot.lane.b32.xlu0 %v1014, 32
        %v1016 = vpop.permute.xlu0 %1015
        %vm1018 = vcmask 388352
        %1019 = vst.msk [vmem:[#allocation2] sm:$0xf] %vm1018, %v1016
        %1020 = vrot.lane.b32.xlu0 %v534, 80
        %v1021 = vpop.permute.xlu0 %1020
        %1022 = vrot.lane.b32.xlu0 %v601, 80
        %v1023 = vpop.permute.xlu0 %1022
        %v1025 = vsel %vm669, %v1021, 0
        %v1028 = vsel %vm669, %v1023, 0
        %1030 = vmatprep.subr.bf16.mxu0 0
        %1031 = vmatpush1.bf16.xpose.msra.mxu0 %v1028
        %1032 = vmatprep.subr.bf16.mxu0 0
        %1033 = vmatpush1.bf16.xpose.msra.mxu0 0
        %1034 = vmatprep.subr.bf16.mxu0 0
        %1035 = vmatpush1.bf16.xpose.msra.mxu0 0
        %1036 = vmatprep.subr.bf16.mxu0 0
        %1037 = vmatpush1.bf16.xpose.msra.mxu0 0
        %1038 = vmatprep.subr.bf16.mxu0 0
        %1039 = vmatpush1.bf16.xpose.msra.mxu0 0
        %1040 = vmatprep.subr.bf16.mxu0 0
        %1041 = vmatpush1.bf16.xpose.msra.mxu0 0
        %1042 = vmatprep.subr.bf16.mxu0 0
        %1043 = vmatpush1.bf16.xpose.msra.mxu0 0
        %1044 = vmatprep.subr.bf16.mxu0 0
        %1045 = vmatpush1.bf16.xpose.msra.mxu0 0
        %1046 = vmatprep.subr.bf16.mxu0 0
        %1047 = vmatpush1.bf16.xpose.msra.mxu0 0
        %1048 = vmatprep.subr.bf16.mxu0 0
        %1049 = vmatpush1.bf16.xpose.msra.mxu0 0
        %1050 = vmatprep.subr.bf16.mxu0 0
        %1051 = vmatpush1.bf16.xpose.msra.mxu0 0
        %1052 = vmatprep.subr.bf16.mxu0 0
        %1053 = vmatpush1.bf16.xpose.msra.mxu0 0
        %1054 = vmatprep.subr.bf16.mxu0 0
        %1055 = vmatpush1.bf16.xpose.msra.mxu0 0
        %1056 = vmatprep.subr.bf16.mxu0 0
        %1057 = vmatpush1.bf16.xpose.msra.mxu0 0
        %1058 = vmatprep.subr.bf16.mxu0 0
        %1059 = vmatpush1.bf16.xpose.msra.mxu0 0
        %1060 = vmatprep.subr.bf16.mxu0 0
        %1061 = vmatpush1.bf16.xpose.msra.mxu0 0
        %1062 = vmatprep.mubr.bf16.mxu0 0
        %1063 = vmatmul.mubr.bf16.gmra.mrb[0].mxu0 %v1025
        %v1064 = vpop.f32.mrb[0].mxu0
        %v1065 = vadd.f32 0.0, %v1064
        %v1066 = vpop.f32.mrb[0].mxu0
        %v1067 = vpop.f32.mrb[0].mxu0
        %v1068 = vpop.f32.mrb[0].mxu0
        %1069 = vdwg.mxu0
        %v1070 = vsel %vm716, %v1065, -inf
        %1071 = vmax.xlane.f32.xlu0 %v1070
        %v1072 = vpop.xlane.xlu0 %1071
        %v1073 = vsub.f32 %v1065, %v1072
        %v1074 = vmul.f32 %v1073, 1.442695
        %v1075 = vpow.pop %v1074
        %v1076 = vsel %vm716, %v1075, 0.0
        %1077 = vadd.xlane.f32.xlu0 %v1076
        %v1078 = vpop.xlane.xlu0 %1077
        %v1079 = vrcp.pop %v1078
        %v1080 = vmul.f32 %v1075, %v1079
        %v1081 = vpack.c.bf16 %v1080, %v1080
        %1082 = vrot.lane.b32.xlu0 %v668, 80
        %v1083 = vpop.permute.xlu0 %1082
        %v1085 = vsel %vm716, %v1081, 0
        %v1088 = vsel %vm732, %v1083, 0
        %1090 = vmatprep.subr.bf16.mxu0 0
        %1091 = vmatpush1.bf16.msra.mxu0 %v1088
        %1092 = vmatprep.subr.bf16.mxu0 0
        %1093 = vmatpush1.bf16.msra.mxu0 0
        %1094 = vmatprep.subr.bf16.mxu0 0
        %1095 = vmatpush1.bf16.msra.mxu0 0
        %1096 = vmatprep.subr.bf16.mxu0 0
        %1097 = vmatpush1.bf16.msra.mxu0 0
        %1098 = vmatprep.subr.bf16.mxu0 0
        %1099 = vmatpush1.bf16.msra.mxu0 0
        %1100 = vmatprep.subr.bf16.mxu0 0
        %1101 = vmatpush1.bf16.msra.mxu0 0
        %1102 = vmatprep.subr.bf16.mxu0 0
        %1103 = vmatpush1.bf16.msra.mxu0 0
        %1104 = vmatprep.subr.bf16.mxu0 0
        %1105 = vmatpush1.bf16.msra.mxu0 0
        %1106 = vmatprep.subr.bf16.mxu0 0
        %1107 = vmatpush1.bf16.msra.mxu0 0
        %1108 = vmatprep.subr.bf16.mxu0 0
        %1109 = vmatpush1.bf16.msra.mxu0 0
        %1110 = vmatprep.subr.bf16.mxu0 0
        %1111 = vmatpush1.bf16.msra.mxu0 0
        %1112 = vmatprep.subr.bf16.mxu0 0
        %1113 = vmatpush1.bf16.msra.mxu0 0
        %1114 = vmatprep.subr.bf16.mxu0 0
        %1115 = vmatpush1.bf16.msra.mxu0 0
        %1116 = vmatprep.subr.bf16.mxu0 0
        %1117 = vmatpush1.bf16.msra.mxu0 0
        %1118 = vmatprep.subr.bf16.mxu0 0
        %1119 = vmatpush1.bf16.msra.mxu0 0
        %1120 = vmatprep.subr.bf16.mxu0 0
        %1121 = vmatpush1.bf16.msra.mxu0 0
        %1122 = vmatprep.mubr.bf16.mxu0 0
        %1123 = vmatmul.mubr.bf16.gmra.mrb[0].mxu0 %v1085
        %v1124 = vpop.f32.mrb[0].mxu0
        %v1125 = vadd.f32 0.0, %v1124
        %v1126 = vpop.f32.mrb[0].mxu0
        %v1127 = vpop.f32.mrb[0].mxu0
        %v1128 = vpop.f32.mrb[0].mxu0
        %1129 = vdwg.mxu0
        %v1130 = vpack.c.bf16 %v1125, %v1125
        %v1132 = vunpack.c.l.b16 %v1130
        %v1133 = vpack.c.b16 %v1132, %v1132
        %1134 = vrot.lane.b32.xlu0 %v1133, 48
        %v1135 = vpop.permute.xlu0 %1134
        %vm1137 = vcmask 519552
        %1138 = vst.msk [vmem:[#allocation2] sm:$0xf] %vm1137, %v1135
        %v1139 = vld [vmem:[#allocation2] sm:$0xf]
        %v1140 = vld [vmem:[%s9] sm:$0xf]
        %v1141 = vld [vmem:[%s9 + $0x4] sm:$0xf]
        %v1142 = vld [vmem:[%s9 + $0x8] sm:$0xf]
        %v1143 = vld [vmem:[%s9 + $0xc] sm:$0xf]
        %v1144 = vld [vmem:[%s9 + $0x10] sm:$0xf]
        %v1145 = vld [vmem:[%s9 + $0x14] sm:$0xf]
        %v1146 = vld [vmem:[%s9 + $0x18] sm:$0xf]
        %v1147 = vld [vmem:[%s9 + $0x1c] sm:$0xf]
        %v1148 = vld [vmem:[%s10] sm:$0x1]
        %v1150 = vlaneseq
        %v1151 = vshrl.u32 %v1150, 7
        %v1152 = vsub.s32 0, %v1151
        %v1153 = vrot.slane %v1148, %v1152
        %v1163 = vunpack.c.l.b16 %v1140
        %v1164 = vunpack.c.l.b16 %v1141
        %v1165 = vunpack.c.l.b16 %v1142
        %v1166 = vunpack.c.l.b16 %v1143
        %v1167 = vunpack.c.l.b16 %v1144
        %v1168 = vunpack.c.l.b16 %v1145
        %v1169 = vunpack.c.l.b16 %v1146
        %v1170 = vunpack.c.l.b16 %v1147
        %v1171 = vpack.c.b16 %v1164, %v1163
        %v1172 = vpack.c.b16 %v1166, %v1165
        %v1173 = vpack.c.b16 %v1168, %v1167
        %v1174 = vpack.c.b16 %v1170, %v1169
        %vm1179 = vcmask 523264
        %v1181 = vsel %vm1179, %v1139, 0
        %1183 = vmatprep.subr.bf16.mxu0 0
        %1184 = vmatpush1.bf16.msra.mxu0 %v1171
        %1185 = vmatprep.subr.bf16.mxu0 0
        %1186 = vmatpush1.bf16.msra.mxu0 %v1172
        %1187 = vmatprep.subr.bf16.mxu0 0
        %1188 = vmatpush1.bf16.msra.mxu0 %v1173
        %1189 = vmatprep.subr.bf16.mxu0 0
        %1190 = vmatpush1.bf16.msra.mxu0 %v1174
        %1191 = vmatprep.subr.bf16.mxu0 0
        %1192 = vmatpush1.bf16.msra.mxu0 0
        %1193 = vmatprep.subr.bf16.mxu0 0
        %1194 = vmatpush1.bf16.msra.mxu0 0
        %1195 = vmatprep.subr.bf16.mxu0 0
        %1196 = vmatpush1.bf16.msra.mxu0 0
        %1197 = vmatprep.subr.bf16.mxu0 0
        %1198 = vmatpush1.bf16.msra.mxu0 0
        %1199 = vmatprep.subr.bf16.mxu0 0
        %1200 = vmatpush1.bf16.msra.mxu0 0
        %1201 = vmatprep.subr.bf16.mxu0 0
        %1202 = vmatpush1.bf16.msra.mxu0 0
        %1203 = vmatprep.subr.bf16.mxu0 0
        %1204 = vmatpush1.bf16.msra.mxu0 0
        %1205 = vmatprep.subr.bf16.mxu0 0
        %1206 = vmatpush1.bf16.msra.mxu0 0
        %1207 = vmatprep.subr.bf16.mxu0 0
        %1208 = vmatpush1.bf16.msra.mxu0 0
        %1209 = vmatprep.subr.bf16.mxu0 0
        %1210 = vmatpush1.bf16.msra.mxu0 0
        %1211 = vmatprep.subr.bf16.mxu0 0
        %1212 = vmatpush1.bf16.msra.mxu0 0
        %1213 = vmatprep.subr.bf16.mxu0 0
        %1214 = vmatpush1.bf16.msra.mxu0 0
        %1215 = vmatprep.mubr.bf16.mxu0 0
        %1216 = vmatmul.mubr.bf16.gmra.mrb[0].mxu0 %v1181
        %v1217 = vpop.f32.mrb[0].mxu0
        %v1218 = vadd.f32 %v1153, %v1217
        %v1219 = vpop.f32.mrb[0].mxu0
        %v1220 = vpop.f32.mrb[0].mxu0
        %v1221 = vpop.f32.mrb[0].mxu0
        %1222 = vdwg.mxu0
        %1223 = vst.msk [vmem:[%s447] sm:$0xff] %vm490, %v1218
        %s1224 = sand.u32 %s281, 1
        %s1225 = scalar_lea.sflag [#allocation5], %s1224
        %s1226 = sand.u32 %s281, 1
        %s1227 = smul.addr %s1226, 8
        %s1228 = scalar_lea.vmem [#allocation9], %s1227
        // Predicated region
        $region77: #{tpu_custom_call.1} parent=63 // pred_check
          %p1229 = pneg %p291
        $region78: #{tpu_custom_call.1} parent=63 // pred_check_branch
          %1231 = sbr.rel (%p1229) target = $region80
        $region79: #{tpu_custom_call.1} parent=63 // pred_region
          %s1233 = ssub.s32 128, 128
          %1234 = vsyncadd %s1225, %s1233
          %s1235 = smul.addr %s27, 128
          %s1236 = scalar_lea.hbm %s11, %s1235
          %s1238 = sshll.u32 %s1228, 4
          %s1239 = int_to_ptr.vmem [resolvable:$true] %s1238
          %1241 = dma.vmem_to_hbm [thread:$0]  %s1239, 128, %s1236, %s1225
        $region80: #{tpu_custom_call.1} parent=63 // pred_fallthru
          _
      $region64: #{tpu_custom_call.1} parent=5 // pred_fallthru
        _
      %p1242 = scmp.le.s32.totalorder 2, %s22
      // Predicated region
      $region81: #{tpu_custom_call.1} parent=5 // pred_check
        %p1243 = pneg %p1242
      $region82: #{tpu_custom_call.1} parent=5 // pred_check_branch
        %1245 = sbr.rel (%p1243) target = $region84
      $region83: #{tpu_custom_call.1} parent=5 // pred_region
        %s1246 = ssub.s32 %s22, 2
        // Predicated region
        $region85: #{tpu_custom_call.1} parent=83 // pred_check
          %p1247 = pneg %p297
        $region86: #{tpu_custom_call.1} parent=83 // pred_check_branch
          %1249 = sbr.rel (%p1247) target = $region88
        $region87: #{tpu_custom_call.1} parent=83 // pred_region
          %s1250 = sand.u32 %s282, 1
          %s1251 = scalar_lea.sflag [#allocation5], %s1250
          %s1252 = sand.u32 %s282, 1
          %s1253 = smul.addr %s1252, 8
          %s1254 = scalar_lea.vmem [#allocation9], %s1253
          %1255 = dma.done %s1251, 128
        $region88: #{tpu_custom_call.1} parent=83 // pred_fallthru
          _
      $region84: #{tpu_custom_call.1} parent=5 // pred_fallthru
        _
    $region6: #{tpu_custom_call.1} parent=1 // loop_footer
      %s26 = sadd.s32 1, %s22
    $region7: #{tpu_custom_call.1} parent=1 // loop_footer_branch
      %21 = sbr.rel target = $region3
    $region8: #{tpu_custom_call.1} parent=1 // loop_exit
      _
    %1256 = vsyncpa [#allocation4], 1
    %s1257 = scalar_lea.sflag [#allocation4], 1
    %1258 = vsyncpa %s1257, 1
    %1259 = vsyncpa [#allocation7], 1
    %1260 = vsyncpa [#allocation5], 1
    %s1261 = scalar_lea.sflag [#allocation5], 1
    %1262 = vsyncpa %s1261, 1

</llo_original>
